<compile_context>
chip_gen: v7x
topology: tpu7x:2x2x1
jax: 0.10.0
libtpu: 0.0.40
codegen_flags: <defaults>
</compile_context>

<pallas_src>
import functools

import jax
import jax.numpy as jnp
from jax.experimental import pallas as pl
from jax.experimental.pallas import tpu as pltpu

# Conservative scoped-VMEM cap: safe on v5e/v6e (128 MiB phys) and v7x (64 MiB).
_VMEM_LIMIT = 32 * 1024 * 1024

# Tile targets for the projection matmuls (f32 worst case: ~4-5 MiB working set
# with double buffering -> comfortably under the limit on every generation).
_TM_TARGET = 512   # rows of x           (align 8)
_TN_TARGET = 256   # output features     (align 128, MXU-facing)
_TK_TARGET = 512   # contraction         (align 128)


# ----------------------------- helpers -----------------------------

def _tile(dim, target, align):
    """Largest multiple of `align` that divides `dim` and is <= target; else `dim`."""
    if dim <= target:
        return dim
    t = (target // align) * align
    while t >= align:
        if dim % t == 0:
            return t
        t -= align
    return dim


def _choose_head_group(num_heads, seq_len, head_dim, itemsize):
    """Pick how many heads to process per attention grid step.

    Valid G must divide H, satisfy the (8,128) block constraint on the head
    axis (G == H or G % 8 == 0), and produce a lane-dense output slab
    (G*Dh == C or G*Dh % 128 == 0).  Among valid values, prefer the largest
    that keeps the per-step VMEM footprint bounded.
    """
    C = num_heads * head_dim
    valid = []
    for g in range(num_heads, 0, -1):
        if num_heads % g:
            continue
        if not (g == num_heads or g % 8 == 0):
            continue
        if not (g * head_dim == C or (g * head_dim) % 128 == 0):
            continue
        valid.append(g)
    if not valid:
        return num_heads
    budget = 8 * 1024 * 1024
    for g in valid:
        scores = g * seq_len * seq_len * 4                       # f32 scores
        qkv_tiles = 3 * 2 * g * seq_len * head_dim * itemsize    # double-buffered
        out_tile = 2 * seq_len * g * head_dim * itemsize
        if scores + qkv_tiles + out_tile <= budget:
            return g
    return valid[-1]


# ----------------------------- Pallas kernels -----------------------------

def _linear_kernel_nobias(x_ref, w_ref, o_ref, acc_ref):
    # x: (tm, tk), w: (tn, tk) [torch (out,in) layout] -> o: (tm, tn)
    @pl.when(pl.program_id(2) == 0)
    def _():
        acc_ref[...] = jnp.zeros_like(acc_ref)

    acc_ref[...] += jax.lax.dot_general(
        x_ref[...], w_ref[...],
        dimension_numbers=(((1,), (1,)), ((), ())),   # contract K, no host w.T
        preferred_element_type=jnp.float32)

    @pl.when(pl.program_id(2) == pl.num_programs(2) - 1)
    def _():
        o_ref[...] = acc_ref[...].astype(o_ref.dtype)


def _linear_kernel_bias(x_ref, w_ref, b_ref, o_ref, acc_ref):
    @pl.when(pl.program_id(2) == 0)
    def _():
        acc_ref[...] = jnp.zeros_like(acc_ref)

    acc_ref[...] += jax.lax.dot_general(
        x_ref[...], w_ref[...],
        dimension_numbers=(((1,), (1,)), ((), ())),
        preferred_element_type=jnp.float32)

    @pl.when(pl.program_id(2) == pl.num_programs(2) - 1)
    def _():
        # Bias add fused into the last K step only (kept out of the inner loop).
        o_ref[...] = (acc_ref[...] + b_ref[...].astype(jnp.float32)).astype(o_ref.dtype)


def _attn_kernel(q_ref, k_ref, v_ref, o_ref, *, scale):
    # q/k/v refs: (N, G, Dh) slices of the packed qkv tensor; o_ref: (N, G*Dh).
    N, G, Dh = q_ref.shape
    # Head-leading layout for batched MXU matmuls (in-VMEM transpose, not HBM).
    q = jnp.swapaxes(q_ref[...], 0, 1)          # (G, N, Dh)
    k = jnp.swapaxes(k_ref[...], 0, 1)          # (G, N, Dh)
    v = jnp.swapaxes(v_ref[...], 0, 1)          # (G, N, Dh)

    # scores = q @ k^T * scale, contracting Dh (no explicit .T materialized).
    s = jnp.einsum('gqd,gkd->gqk', q, k,
                   preferred_element_type=jnp.float32) * scale     # (G, N, N) f32

    # Numerically stable softmax in f32; reciprocal on the EUP (approx=True).
    s = s - jnp.max(s, axis=-1, keepdims=True)
    p = jnp.exp(s)
    p = p * pl.reciprocal(jnp.sum(p, axis=-1, keepdims=True), approx=True)

    o = jnp.einsum('gqk,gkd->gqd', p.astype(v.dtype), v,
                   preferred_element_type=jnp.float32)              # (G, N, Dh) f32

    # Store lane-dense: (N, G*Dh) slab of the (B, N, C) output.
    o = jnp.swapaxes(o, 0, 1).reshape(N, G * Dh)
    o_ref[...] = o.astype(o_ref.dtype)


# ----------------------------- wrappers -----------------------------

def pallas_linear(x, w, bias=None):
    """y = x @ w.T (+ bias), with w in torch (out_features, in_features) layout."""
    M, K = x.shape
    Nout, K2 = w.shape
    assert K == K2
    tm = _tile(M, _TM_TARGET, 8)
    tn = _tile(Nout, _TN_TARGET, 128)
    tk = _tile(K, _TK_TARGET, 128)
    grid = (M // tm, Nout // tn, K // tk)

    x_spec = pl.BlockSpec((tm, tk), lambda i, j, k: (i, k))
    w_spec = pl.BlockSpec((tn, tk), lambda i, j, k: (j, k))
    o_spec = pl.BlockSpec((tm, tn), lambda i, j, k: (i, j))
    scratch = [pltpu.VMEM((tm, tn), jnp.float32)]
    params = pltpu.CompilerParams(
        dimension_semantics=("parallel", "parallel", "arbitrary"),
        vmem_limit_bytes=_VMEM_LIMIT)

    if bias is None:
        return pl.pallas_call(
            _linear_kernel_nobias,
            out_shape=jax.ShapeDtypeStruct((M, Nout), x.dtype),
            grid=grid,
            in_specs=[x_spec, w_spec],
            out_specs=o_spec,
            scratch_shapes=scratch,
            compiler_params=params,
        )(x, w)

    b2 = bias.reshape(1, Nout)
    b_spec = pl.BlockSpec((1, tn), lambda i, j, k: (0, j))
    return pl.pallas_call(
        _linear_kernel_bias,
        out_shape=jax.ShapeDtypeStruct((M, Nout), x.dtype),
        grid=grid,
        in_specs=[x_spec, w_spec, b_spec],
        out_specs=o_spec,
        scratch_shapes=scratch,
        compiler_params=params,
    )(x, w, b2)


def pallas_mha(qkv, scale):
    """qkv: (B, N, 3, H, Dh) packed projection output -> (B, N, C) attention out."""
    B, N, _three, H, Dh = qkv.shape
    C = H * Dh
    G = _choose_head_group(H, N, Dh, qkv.dtype.itemsize)
    n_hg = H // G

    qkv_block = (None, N, None, G, Dh)   # squeeze batch and the q/k/v axis

    def qkv_map(which):
        return lambda b, hg: (b, 0, which, hg, 0)

    kernel = functools.partial(_attn_kernel, scale=scale)
    return pl.pallas_call(
        kernel,
        out_shape=jax.ShapeDtypeStruct((B, N, C), qkv.dtype),
        grid=(B, n_hg),
        in_specs=[pl.BlockSpec(qkv_block, qkv_map(0)),   # q
                  pl.BlockSpec(qkv_block, qkv_map(1)),   # k
                  pl.BlockSpec(qkv_block, qkv_map(2))],  # v
        out_specs=pl.BlockSpec((None, N, G * Dh), lambda b, hg: (b, 0, hg)),
        compiler_params=pltpu.CompilerParams(
            dimension_semantics=("parallel", "parallel"),
            vmem_limit_bytes=_VMEM_LIMIT),
    )(qkv, qkv, qkv)


def attention_forward(x, w_qkv, w_proj, b_proj, num_heads):
    """Pallas equivalent of Attention.forward.

    x:      (B, N, C)
    w_qkv:  (3C, C)  torch Linear weight (out, in), no bias (qkv_bias=False)
    w_proj: (C, C)   torch Linear weight (out, in)
    b_proj: (C,)
    """
    B, N, C = x.shape
    head_dim = C // num_heads
    scale = head_dim ** (-0.5)

    # 1) qkv projection (tiled Pallas matmul, torch-layout weight, no bias).
    qkv = pallas_linear(x.reshape(B * N, C), w_qkv)            # (B*N, 3C)
    qkv = qkv.reshape(B, N, 3, num_heads, head_dim)            # free reshape

    # 2) fused multi-head attention; q/k/v and head groups selected by
    #    BlockSpec index_maps, output written directly in (B, N, C) layout.
    attn_out = pallas_mha(qkv, scale)                          # (B, N, C)

    # 3) output projection + bias (tiled Pallas matmul, bias fused at last K step).
    y = pallas_linear(attn_out.reshape(B * N, C), w_proj, bias=b_proj)
    return y.reshape(B, N, C)


# ----------------------------- reference (plain JAX) -----------------------------

def attention_reference(x, w_qkv, w_proj, b_proj, num_heads):
    B, N, C = x.shape
    head_dim = C // num_heads
    scale = head_dim ** (-0.5)
    qkv = x @ w_qkv.T
    qkv = qkv.reshape(B, N, 3, num_heads, head_dim)
    qkv = jnp.transpose(qkv, (2, 0, 3, 1, 4))
    q, k, v = qkv[0], qkv[1], qkv[2]
    attn = jnp.einsum("bhqd,bhkd->bhqk", q, k) * scale
    attn = jax.nn.softmax(attn, axis=-1)
    o = jnp.einsum("bhqk,bhkd->bhqd", attn, v)
    o = jnp.transpose(o, (0, 2, 1, 3)).reshape(B, N, C)
    return o @ w_proj.T + b_proj


# ----------------------------- main -----------------------------

if __name__ == "__main__":
    B, N, C = 2, 8, 32
    num_heads = 8

    key = jax.random.PRNGKey(0)
    kx, kq, kp, kb = jax.random.split(key, 4)

    x = jax.random.normal(kx, (B, N, C), dtype=jnp.float32)
    # Shapes follow nn.Linear(dim, dim*3, bias=False) / nn.Linear(dim, dim).
    w_qkv = jax.random.normal(kq, (3 * C, C), dtype=jnp.float32) * 0.05
    w_proj = jax.random.normal(kp, (C, C), dtype=jnp.float32) * 0.05
    b_proj = jax.random.normal(kb, (C,), dtype=jnp.float32) * 0.01

    fwd = jax.jit(attention_forward, static_argnums=(4,))
    out = fwd(x, w_qkv, w_proj, b_proj, num_heads)
    out = jax.block_until_ready(out)

    ref = attention_reference(x, w_qkv, w_proj, b_proj, num_heads)
    assert out.shape == (B, N, C)
    max_err = float(jnp.max(jnp.abs(out - ref)))
    assert jnp.allclose(out, ref, atol=2e-3, rtol=2e-3), (
        f"mismatch vs JAX reference, max abs err {max_err}")

    print("KERNEL_OK")
</pallas_src>

<mosaic_0001>
module attributes {stable_mosaic.version = 11 : i64} {
  func.func @_attn_kernel(%arg0: i32, %arg1: i32, %arg2: memref<1x8x1x8x4xf32, #tpu.memory_space<vmem>>, %arg3: memref<1x8x1x8x4xf32, #tpu.memory_space<vmem>>, %arg4: memref<1x8x1x8x4xf32, #tpu.memory_space<vmem>>, %arg5: memref<1x8x32xf32, #tpu.memory_space<vmem>>) attributes {dimension_semantics = [#tpu.dimension_semantics<parallel>, #tpu.dimension_semantics<parallel>], iteration_bounds = array<i64: 2, 1>, scalar_prefetch = 0 : i64, scratch_operands = 0 : i64, tpu.core_type = #tpu.core_type<tc>, window_params = [{transform_indices = @transform_0, window_bounds = array<i64: 1, 8, 1, 8, 4>}, {transform_indices = @transform_1, window_bounds = array<i64: 1, 8, 1, 8, 4>}, {transform_indices = @transform_2, window_bounds = array<i64: 1, 8, 1, 8, 4>}, {transform_indices = @transform_3, window_bounds = array<i64: 1, 8, 32>}]} {
    %c0 = arith.constant 0 : index
    %c0_0 = arith.constant 0 : index
    %c0_1 = arith.constant 0 : index
    %c0_2 = arith.constant 0 : index
    %c0_3 = arith.constant 0 : index
    %0 = vector.load %arg2[%c0, %c0_0, %c0_1, %c0_2, %c0_3] : memref<1x8x1x8x4xf32, #tpu.memory_space<vmem>>, vector<1x8x1x8x4xf32>
    %1 = vector.shape_cast %0 : vector<1x8x1x8x4xf32> to vector<8x8x4xf32>
    %2 = tpu.transpose %1, [1, 0, 2] : vector<8x8x4xf32> -> vector<8x8x4xf32>
    %c0_4 = arith.constant 0 : index
    %c0_5 = arith.constant 0 : index
    %c0_6 = arith.constant 0 : index
    %c0_7 = arith.constant 0 : index
    %c0_8 = arith.constant 0 : index
    %3 = vector.load %arg3[%c0_4, %c0_5, %c0_6, %c0_7, %c0_8] : memref<1x8x1x8x4xf32, #tpu.memory_space<vmem>>, vector<1x8x1x8x4xf32>
    %4 = vector.shape_cast %3 : vector<1x8x1x8x4xf32> to vector<8x8x4xf32>
    %5 = tpu.transpose %4, [1, 0, 2] : vector<8x8x4xf32> -> vector<8x8x4xf32>
    %c0_9 = arith.constant 0 : index
    %c0_10 = arith.constant 0 : index
    %c0_11 = arith.constant 0 : index
    %c0_12 = arith.constant 0 : index
    %c0_13 = arith.constant 0 : index
    %6 = vector.load %arg4[%c0_9, %c0_10, %c0_11, %c0_12, %c0_13] : memref<1x8x1x8x4xf32, #tpu.memory_space<vmem>>, vector<1x8x1x8x4xf32>
    %7 = vector.shape_cast %6 : vector<1x8x1x8x4xf32> to vector<8x8x4xf32>
    %8 = tpu.transpose %7, [1, 0, 2] : vector<8x8x4xf32> -> vector<8x8x4xf32>
    "tpu.trace_start"() <{level = 10 : i32, message = "gqd,gkd->gqk"}> : () -> ()
    %cst = arith.constant dense<0.000000e+00> : vector<8x8x8xf32>
    %9 = tpu.matmul %2, %5, %cst {dimension_numbers = #tpu.dot_dimension_numbers<[2], [2], [1], [1], [0, 0, 0, 1, 1, 1], [0], [0]>} : vector<8x8x4xf32>, vector<8x8x4xf32>, vector<8x8x8xf32> -> vector<8x8x8xf32>
    "tpu.trace_stop"() : () -> ()
    %cst_14 = arith.constant 5.000000e-01 : f32
    %10 = vector.broadcast %cst_14 : f32 to vector<8x8x8xf32>
    %11 = arith.mulf %9, %10 : vector<8x8x8xf32>
    %cst_15 = arith.constant dense<0xFF800000> : vector<8x8xf32>
    %12 = vector.multi_reduction <maximumf>, %11, %cst_15 [2] : vector<8x8x8xf32> to vector<8x8xf32>
    %13 = vector.shape_cast %12 : vector<8x8xf32> to vector<8x8x1xf32>
    %14 = vector.broadcast %13 : vector<8x8x1xf32> to vector<8x8x8xf32>
    %15 = arith.subf %11, %14 : vector<8x8x8xf32>
    %16 = math.exp %15 : vector<8x8x8xf32>
    %cst_16 = arith.constant dense<0.000000e+00> : vector<8x8xf32>
    %17 = vector.multi_reduction <add>, %16, %cst_16 [2] : vector<8x8x8xf32> to vector<8x8xf32>
    %18 = vector.shape_cast %17 : vector<8x8xf32> to vector<8x8x1xf32>
    %19 = tpu.reciprocal %18 {approx = true} : vector<8x8x1xf32> -> vector<8x8x1xf32>
    %20 = vector.broadcast %19 : vector<8x8x1xf32> to vector<8x8x8xf32>
    %21 = arith.mulf %16, %20 : vector<8x8x8xf32>
    "tpu.trace_start"() <{level = 10 : i32, message = "gqk,gkd->gqd"}> : () -> ()
    %cst_17 = arith.constant dense<0.000000e+00> : vector<8x8x4xf32>
    %22 = tpu.matmul %21, %8, %cst_17 {dimension_numbers = #tpu.dot_dimension_numbers<[2], [1], [1], [2], [0, 0, 0, 1, 1, 2], [0], [0]>} : vector<8x8x8xf32>, vector<8x8x4xf32>, vector<8x8x4xf32> -> vector<8x8x4xf32>
    "tpu.trace_stop"() : () -> ()
    %23 = tpu.transpose %22, [1, 0, 2] : vector<8x8x4xf32> -> vector<8x8x4xf32>
    %24 = vector.shape_cast %23 : vector<8x8x4xf32> to vector<8x32xf32>
    %c0_18 = arith.constant 0 : index
    %c0_19 = arith.constant 0 : index
    %c0_20 = arith.constant 0 : index
    %25 = vector.load %arg5[%c0_18, %c0_19, %c0_20] : memref<1x8x32xf32, #tpu.memory_space<vmem>>, vector<1x8x32xf32>
    %26 = vector.shape_cast %25 : vector<1x8x32xf32> to vector<8x32xf32>
    %27 = vector.shape_cast %24 : vector<8x32xf32> to vector<1x8x32xf32>
    tpu.vector_store %arg5[%c0_18, %c0_19, %c0_20], %27 {strides = array<i32>} : memref<1x8x32xf32, #tpu.memory_space<vmem>>, vector<1x8x32xf32>,
    return
  }
  func.func @transform_0(%arg0: i32, %arg1: i32) -> (i32, i32, i32, i32, i32) {
    %c0_i32 = arith.constant 0 : i32
    %c0_i32_0 = arith.constant 0 : i32
    %c0_i32_1 = arith.constant 0 : i32
    %c0_i32_2 = arith.constant 0 : i32
    return %arg0, %c0_i32, %c0_i32_0, %arg1, %c0_i32_1 : i32, i32, i32, i32, i32
  }
  func.func @transform_1(%arg0: i32, %arg1: i32) -> (i32, i32, i32, i32, i32) {
    %c0_i32 = arith.constant 0 : i32
    %c1_i32 = arith.constant 1 : i32
    %c0_i32_0 = arith.constant 0 : i32
    %c0_i32_1 = arith.constant 0 : i32
    return %arg0, %c0_i32, %c1_i32, %arg1, %c0_i32_0 : i32, i32, i32, i32, i32
  }
  func.func @transform_2(%arg0: i32, %arg1: i32) -> (i32, i32, i32, i32, i32) {
    %c0_i32 = arith.constant 0 : i32
    %c2_i32 = arith.constant 2 : i32
    %c0_i32_0 = arith.constant 0 : i32
    %c0_i32_1 = arith.constant 0 : i32
    return %arg0, %c0_i32, %c2_i32, %arg1, %c0_i32_0 : i32, i32, i32, i32, i32
  }
  func.func @transform_3(%arg0: i32, %arg1: i32) -> (i32, i32, i32) {
    %c0_i32 = arith.constant 0 : i32
    %c0_i32_0 = arith.constant 0 : i32
    return %arg0, %c0_i32, %arg1 : i32, i32, i32
  }
}

module attributes {stable_mosaic.version = 11 : i64} {
  func.func @_linear_kernel_nobias(%arg0: i32, %arg1: i32, %arg2: i32, %arg3: memref<16x32xf32, #tpu.memory_space<vmem>>, %arg4: memref<96x32xf32, #tpu.memory_space<vmem>>, %arg5: memref<16x96xf32, #tpu.memory_space<vmem>>, %arg6: memref<16x96xf32, #tpu.memory_space<vmem>>) attributes {dimension_semantics = [#tpu.dimension_semantics<parallel>, #tpu.dimension_semantics<parallel>, #tpu.dimension_semantics<arbitrary>], iteration_bounds = array<i64: 1, 1, 1>, scalar_prefetch = 0 : i64, scratch_operands = 1 : i64, tpu.core_type = #tpu.core_type<tc>, window_params = [{transform_indices = @transform_0, window_bounds = array<i64: 16, 32>}, {transform_indices = @transform_1, window_bounds = array<i64: 96, 32>}, {transform_indices = @transform_2, window_bounds = array<i64: 16, 96>}]} {
    %c0_i32 = arith.constant 0 : i32
    %0 = arith.cmpi eq, %arg2, %c0_i32 : i32
    %1 = arith.extui %0 : i1 to i32
    %c0_i32_0 = arith.constant 0 : i32
    %2 = arith.cmpi ne, %1, %c0_i32_0 : i32
    scf.if %2 {
      %cst_10 = arith.constant 0.000000e+00 : f32
      %12 = vector.broadcast %cst_10 : f32 to vector<16x96xf32>
      %c0_11 = arith.constant 0 : index
      %c0_12 = arith.constant 0 : index
      %13 = vector.load %arg6[%c0_11, %c0_12] : memref<16x96xf32, #tpu.memory_space<vmem>>, vector<16x96xf32>
      tpu.vector_store %arg6[%c0_11, %c0_12], %12 {strides = array<i32>} : memref<16x96xf32, #tpu.memory_space<vmem>>, vector<16x96xf32>,
    } else {
    }
    %c0 = arith.constant 0 : index
    %c0_1 = arith.constant 0 : index
    %3 = vector.load %arg6[%c0, %c0_1] : memref<16x96xf32, #tpu.memory_space<vmem>>, vector<16x96xf32>
    %c0_2 = arith.constant 0 : index
    %c0_3 = arith.constant 0 : index
    %4 = vector.load %arg3[%c0_2, %c0_3] : memref<16x32xf32, #tpu.memory_space<vmem>>, vector<16x32xf32>
    %c0_4 = arith.constant 0 : index
    %c0_5 = arith.constant 0 : index
    %5 = vector.load %arg4[%c0_4, %c0_5] : memref<96x32xf32, #tpu.memory_space<vmem>>, vector<96x32xf32>
    %cst = arith.constant dense<0.000000e+00> : vector<16x96xf32>
    %6 = tpu.matmul %4, %5, %cst {dimension_numbers = #tpu.dot_dimension_numbers<[1], [1], [0], [0], [0, 0, 1, 0], [], []>} : vector<16x32xf32>, vector<96x32xf32>, vector<16x96xf32> -> vector<16x96xf32>
    %7 = arith.addf %3, %6 : vector<16x96xf32>
    %c0_6 = arith.constant 0 : index
    %c0_7 = arith.constant 0 : index
    %8 = vector.load %arg6[%c0_6, %c0_7] : memref<16x96xf32, #tpu.memory_space<vmem>>, vector<16x96xf32>
    tpu.vector_store %arg6[%c0_6, %c0_7], %7 {strides = array<i32>} : memref<16x96xf32, #tpu.memory_space<vmem>>, vector<16x96xf32>,
    %c0_i32_8 = arith.constant 0 : i32
    %9 = arith.cmpi eq, %arg2, %c0_i32_8 : i32
    %10 = arith.extui %9 : i1 to i32
    %c0_i32_9 = arith.constant 0 : i32
    %11 = arith.cmpi ne, %10, %c0_i32_9 : i32
    scf.if %11 {
      %c0_10 = arith.constant 0 : index
      %c0_11 = arith.constant 0 : index
      %12 = vector.load %arg6[%c0_10, %c0_11] : memref<16x96xf32, #tpu.memory_space<vmem>>, vector<16x96xf32>
      %c0_12 = arith.constant 0 : index
      %c0_13 = arith.constant 0 : index
      %13 = vector.load %arg5[%c0_12, %c0_13] : memref<16x96xf32, #tpu.memory_space<vmem>>, vector<16x96xf32>
      tpu.vector_store %arg5[%c0_12, %c0_13], %12 {strides = array<i32>} : memref<16x96xf32, #tpu.memory_space<vmem>>, vector<16x96xf32>,
    } else {
    }
    return
  }
  func.func @transform_0(%arg0: i32, %arg1: i32, %arg2: i32) -> (i32, i32) {
    %c0_i32 = arith.constant 0 : i32
    return %arg0, %arg2 : i32, i32
  }
  func.func @transform_1(%arg0: i32, %arg1: i32, %arg2: i32) -> (i32, i32) {
    %c0_i32 = arith.constant 0 : i32
    return %arg1, %arg2 : i32, i32
  }
  func.func @transform_2(%arg0: i32, %arg1: i32, %arg2: i32) -> (i32, i32) {
    %c0_i32 = arith.constant 0 : i32
    return %arg0, %arg1 : i32, i32
  }
}

module attributes {stable_mosaic.version = 11 : i64} {
  func.func @_linear_kernel_bias(%arg0: i32, %arg1: i32, %arg2: i32, %arg3: memref<16x32xf32, #tpu.memory_space<vmem>>, %arg4: memref<32x32xf32, #tpu.memory_space<vmem>>, %arg5: memref<1x32xf32, #tpu.memory_space<vmem>>, %arg6: memref<16x32xf32, #tpu.memory_space<vmem>>, %arg7: memref<16x32xf32, #tpu.memory_space<vmem>>) attributes {dimension_semantics = [#tpu.dimension_semantics<parallel>, #tpu.dimension_semantics<parallel>, #tpu.dimension_semantics<arbitrary>], iteration_bounds = array<i64: 1, 1, 1>, scalar_prefetch = 0 : i64, scratch_operands = 1 : i64, tpu.core_type = #tpu.core_type<tc>, window_params = [{transform_indices = @transform_0, window_bounds = array<i64: 16, 32>}, {transform_indices = @transform_1, window_bounds = array<i64: 32, 32>}, {transform_indices = @transform_2, window_bounds = array<i64: 1, 32>}, {transform_indices = @transform_3, window_bounds = array<i64: 16, 32>}]} {
    %c0_i32 = arith.constant 0 : i32
    %0 = arith.cmpi eq, %arg2, %c0_i32 : i32
    %1 = arith.extui %0 : i1 to i32
    %c0_i32_0 = arith.constant 0 : i32
    %2 = arith.cmpi ne, %1, %c0_i32_0 : i32
    scf.if %2 {
      %cst_10 = arith.constant 0.000000e+00 : f32
      %12 = vector.broadcast %cst_10 : f32 to vector<16x32xf32>
      %c0_11 = arith.constant 0 : index
      %c0_12 = arith.constant 0 : index
      %13 = vector.load %arg7[%c0_11, %c0_12] : memref<16x32xf32, #tpu.memory_space<vmem>>, vector<16x32xf32>
      tpu.vector_store %arg7[%c0_11, %c0_12], %12 {strides = array<i32>} : memref<16x32xf32, #tpu.memory_space<vmem>>, vector<16x32xf32>,
    } else {
    }
    %c0 = arith.constant 0 : index
    %c0_1 = arith.constant 0 : index
    %3 = vector.load %arg7[%c0, %c0_1] : memref<16x32xf32, #tpu.memory_space<vmem>>, vector<16x32xf32>
    %c0_2 = arith.constant 0 : index
    %c0_3 = arith.constant 0 : index
    %4 = vector.load %arg3[%c0_2, %c0_3] : memref<16x32xf32, #tpu.memory_space<vmem>>, vector<16x32xf32>
    %c0_4 = arith.constant 0 : index
    %c0_5 = arith.constant 0 : index
    %5 = vector.load %arg4[%c0_4, %c0_5] : memref<32x32xf32, #tpu.memory_space<vmem>>, vector<32x32xf32>
    %cst = arith.constant dense<0.000000e+00> : vector<16x32xf32>
    %6 = tpu.matmul %4, %5, %cst {dimension_numbers = #tpu.dot_dimension_numbers<[1], [1], [0], [0], [0, 0, 1, 0], [], []>} : vector<16x32xf32>, vector<32x32xf32>, vector<16x32xf32> -> vector<16x32xf32>
    %7 = arith.addf %3, %6 : vector<16x32xf32>
    %c0_6 = arith.constant 0 : index
    %c0_7 = arith.constant 0 : index
    %8 = vector.load %arg7[%c0_6, %c0_7] : memref<16x32xf32, #tpu.memory_space<vmem>>, vector<16x32xf32>
    tpu.vector_store %arg7[%c0_6, %c0_7], %7 {strides = array<i32>} : memref<16x32xf32, #tpu.memory_space<vmem>>, vector<16x32xf32>,
    %c0_i32_8 = arith.constant 0 : i32
    %9 = arith.cmpi eq, %arg2, %c0_i32_8 : i32
    %10 = arith.extui %9 : i1 to i32
    %c0_i32_9 = arith.constant 0 : i32
    %11 = arith.cmpi ne, %10, %c0_i32_9 : i32
    scf.if %11 {
      %c0_10 = arith.constant 0 : index
      %c0_11 = arith.constant 0 : index
      %12 = vector.load %arg7[%c0_10, %c0_11] : memref<16x32xf32, #tpu.memory_space<vmem>>, vector<16x32xf32>
      %c0_12 = arith.constant 0 : index
      %c0_13 = arith.constant 0 : index
      %13 = vector.load %arg5[%c0_12, %c0_13] : memref<1x32xf32, #tpu.memory_space<vmem>>, vector<1x32xf32>
      %14 = vector.broadcast %13 : vector<1x32xf32> to vector<16x32xf32>
      %15 = arith.addf %12, %14 : vector<16x32xf32>
      %c0_14 = arith.constant 0 : index
      %c0_15 = arith.constant 0 : index
      %16 = vector.load %arg6[%c0_14, %c0_15] : memref<16x32xf32, #tpu.memory_space<vmem>>, vector<16x32xf32>
      tpu.vector_store %arg6[%c0_14, %c0_15], %15 {strides = array<i32>} : memref<16x32xf32, #tpu.memory_space<vmem>>, vector<16x32xf32>,
    } else {
    }
    return
  }
  func.func @transform_0(%arg0: i32, %arg1: i32, %arg2: i32) -> (i32, i32) {
    %c0_i32 = arith.constant 0 : i32
    return %arg0, %arg2 : i32, i32
  }
  func.func @transform_1(%arg0: i32, %arg1: i32, %arg2: i32) -> (i32, i32) {
    %c0_i32 = arith.constant 0 : i32
    return %arg1, %arg2 : i32, i32
  }
  func.func @transform_2(%arg0: i32, %arg1: i32, %arg2: i32) -> (i32, i32) {
    %c0_i32 = arith.constant 0 : i32
    %c0_i32_0 = arith.constant 0 : i32
    return %c0_i32, %arg1 : i32, i32
  }
  func.func @transform_3(%arg0: i32, %arg1: i32, %arg2: i32) -> (i32, i32) {
    %c0_i32 = arith.constant 0 : i32
    return %arg0, %arg1 : i32, i32
  }
}

</mosaic_0001>

<llo_original>
// kernel: attention_forward.3
$region0: #{attention_forward.3}
  #allocation0 [shape = 'u32[]', space=smem, size = 0x4, offset = 0x4, fixed_abs, tag = 'smem constant byte address 0x4 - core index']
  #allocation1 [shape = 'u32[144,128]{1,0:T(1,128)}', space=vmem, size = 0x12000, scoped, tag = 'internal scratch']
  #allocation2 [shape = 'f32[16,96]{1,0:T(8,128)}', space=vmem, size = 0x2000, scoped, tag = 'scratch operand']
  %s0 = inlined_call_operand.vmem [shape: f32[16,32], index: 0, kind: input, shape index: {}]
  %s1 = inlined_call_operand.vmem [shape: f32[96,32], index: 1, kind: input, shape index: {}]
  %s2 = inlined_call_operand.vmem [shape: f32[16,96], index: 2, kind: output, shape index: {}]
  %s3 = sld [smem:[#allocation0]]
  $region26: #{attention_forward.3} parent=0
    _
  %s5 = ssub.s32 1, %s3
  %s6 = scalar_select 0, %s5, %s3
  // Predicated region
  $region2: #{attention_forward.3} parent=0 // pred_check
    _
  $region3: #{attention_forward.3} parent=0 // pred_check_branch
    %8 = sbr.rel (0) target = $region5
  $region4: #{attention_forward.3} parent=0 // pred_region
    _
  $region5: #{attention_forward.3} parent=0 // pred_fallthru
    _
  // Predicated region
  $region6: #{attention_forward.3} parent=0 // pred_check
    _
  $region7: #{attention_forward.3} parent=0 // pred_check_branch
    %10 = sbr.rel (0) target = $region9
  $region8: #{attention_forward.3} parent=0 // pred_region
    _
  $region9: #{attention_forward.3} parent=0 // pred_fallthru
    _
  %p11 = scmp.eq.s32.totalorder 0, 0
  // Predicated region
  $region10: #{attention_forward.3} parent=0 // pred_check
    %p12 = pneg %p11
  $region11: #{attention_forward.3} parent=0 // pred_check_branch
    %14 = sbr.rel (%p12) target = $region13
  $region12: #{attention_forward.3} parent=0 // pred_region
    %vm15 = vcmask 785408
    %16 = vst.msk [vmem:[#allocation2] sm:$0xff] %vm15, 0.0
    %17 = vst.msk [vmem:[#allocation2 + $0x8] sm:$0xff] %vm15, 0.0
  $region13: #{attention_forward.3} parent=0 // pred_fallthru
    _
  %v18 = vld [vmem:[#allocation2] sm:$0xff]
  %v19 = vld [vmem:[#allocation2 + $0x8] sm:$0xff]
  %v20 = vld [vmem:[%s0] sm:$0xff]
  %v21 = vld [vmem:[%s0 + $0x8] sm:$0xff]
  %v22 = vld [vmem:[%s1] sm:$0xff]
  %v23 = vld [vmem:[%s1 + $0x8] sm:$0xff]
  %v24 = vld [vmem:[%s1 + $0x10] sm:$0xff]
  %v25 = vld [vmem:[%s1 + $0x18] sm:$0xff]
  %v26 = vld [vmem:[%s1 + $0x20] sm:$0xff]
  %v27 = vld [vmem:[%s1 + $0x28] sm:$0xff]
  %v28 = vld [vmem:[%s1 + $0x30] sm:$0xff]
  %v29 = vld [vmem:[%s1 + $0x38] sm:$0xff]
  %v30 = vld [vmem:[%s1 + $0x40] sm:$0xff]
  %v31 = vld [vmem:[%s1 + $0x48] sm:$0xff]
  %v32 = vld [vmem:[%s1 + $0x50] sm:$0xff]
  %v33 = vld [vmem:[%s1 + $0x58] sm:$0xff]
  %vm34 = vcmask 261120
  %v36 = vsel %vm34, %v20, 0
  %v39 = vsel %vm34, %v21, 0
  %v42 = vsel %vm34, %v22, 0
  %v45 = vsel %vm34, %v23, 0
  %v48 = vsel %vm34, %v24, 0
  %v51 = vsel %vm34, %v25, 0
  %v54 = vsel %vm34, %v26, 0
  %v57 = vsel %vm34, %v27, 0
  %v60 = vsel %vm34, %v28, 0
  %v63 = vsel %vm34, %v29, 0
  %v66 = vsel %vm34, %v30, 0
  %v69 = vsel %vm34, %v31, 0
  %v72 = vsel %vm34, %v32, 0
  %v75 = vsel %vm34, %v33, 0
  %77 = vmatprep.subr.mxu0 0.0
  %78 = vmatpush1.xpose.msra.mxu0 %v42
  %79 = vmatprep.subr.mxu0 0.0
  %80 = vmatpush1.xpose.msra.mxu0 %v45
  %81 = vmatprep.subr.mxu0 0.0
  %82 = vmatpush1.xpose.msra.mxu0 %v48
  %83 = vmatprep.subr.mxu0 0.0
  %84 = vmatpush1.xpose.msra.mxu0 %v51
  %85 = vmatprep.subr.mxu0 0.0
  %86 = vmatpush1.xpose.msra.mxu0 %v54
  %87 = vmatprep.subr.mxu0 0.0
  %88 = vmatpush1.xpose.msra.mxu0 %v57
  %89 = vmatprep.subr.mxu0 0.0
  %90 = vmatpush1.xpose.msra.mxu0 %v60
  %91 = vmatprep.subr.mxu0 0.0
  %92 = vmatpush1.xpose.msra.mxu0 %v63
  %93 = vmatprep.subr.mxu0 0.0
  %94 = vmatpush1.xpose.msra.mxu0 %v66
  %95 = vmatprep.subr.mxu0 0.0
  %96 = vmatpush1.xpose.msra.mxu0 %v69
  %97 = vmatprep.subr.mxu0 0.0
  %98 = vmatpush1.xpose.msra.mxu0 %v72
  %99 = vmatprep.subr.mxu0 0.0
  %100 = vmatpush1.xpose.msra.mxu0 %v75
  %101 = vmatprep.subr.mxu0 0.0
  %102 = vmatpush1.xpose.msra.mxu0 0.0
  %103 = vmatprep.subr.mxu0 0.0
  %104 = vmatpush1.xpose.msra.mxu0 0.0
  %105 = vmatprep.subr.mxu0 0.0
  %106 = vmatpush1.xpose.msra.mxu0 0.0
  %107 = vmatprep.subr.mxu0 0.0
  %108 = vmatpush1.xpose.msra.mxu0 0.0
  %109 = vmatprep.subr.mxu0 0.0
  %110 = vmatpush1.xpose.msra.mxu0 0.0
  %111 = vmatprep.subr.mxu0 0.0
  %112 = vmatpush1.xpose.msra.mxu0 0.0
  %113 = vmatprep.subr.mxu0 0.0
  %114 = vmatpush1.xpose.msra.mxu0 0.0
  %115 = vmatprep.subr.mxu0 0.0
  %116 = vmatpush1.xpose.msra.mxu0 0.0
  %117 = vmatprep.subr.mxu0 0.0
  %118 = vmatpush1.xpose.msra.mxu0 0.0
  %119 = vmatprep.subr.mxu0 0.0
  %120 = vmatpush1.xpose.msra.mxu0 0.0
  %121 = vmatprep.subr.mxu0 0.0
  %122 = vmatpush1.xpose.msra.mxu0 0.0
  %123 = vmatprep.subr.mxu0 0.0
  %124 = vmatpush1.xpose.msra.mxu0 0.0
  %125 = vmatprep.subr.mxu0 0.0
  %126 = vmatpush1.xpose.msra.mxu0 0.0
  %127 = vmatprep.subr.mxu0 0.0
  %128 = vmatpush1.xpose.msra.mxu0 0.0
  %129 = vmatprep.subr.mxu0 0.0
  %130 = vmatpush1.xpose.msra.mxu0 0.0
  %131 = vmatprep.subr.mxu0 0.0
  %132 = vmatpush1.xpose.msra.mxu0 0.0
  %133 = vmatprep.subr.mxu0 0.0
  %134 = vmatpush1.xpose.msra.mxu0 0.0
  %135 = vmatprep.subr.mxu0 0.0
  %136 = vmatpush1.xpose.msra.mxu0 0.0
  %137 = vmatprep.subr.mxu0 0.0
  %138 = vmatpush1.xpose.msra.mxu0 0.0
  %139 = vmatprep.subr.mxu0 0.0
  %140 = vmatpush1.xpose.msra.mxu0 0.0
  %141 = vmatprep.mubr.f32.mxu0 0.0
  %142 = vmatmul.mubr.f32.gmra.mrb[0].mxu0 %v36
  %v143 = vpop.f32.mrb[0].mxu0
  %v144 = vadd.f32 0.0, %v143
  %v145 = vpop.f32.mrb[0].mxu0
  %146 = vmatprep.mubr.f32.mxu0 0.0
  %147 = vmatmul.mubr.f32.gmra.mrb[0].mxu0 %v39
  %v148 = vpop.f32.mrb[0].mxu0
  %v149 = vadd.f32 0.0, %v148
  %v150 = vpop.f32.mrb[0].mxu0
  %151 = vdwg.mxu0
  %v152 = vadd.f32 %v18, %v144
  %v153 = vadd.f32 %v19, %v149
  %vm154 = vcmask 785408
  %155 = vst.msk [vmem:[#allocation2] sm:$0xff] %vm154, %v152
  %156 = vst.msk [vmem:[#allocation2 + $0x8] sm:$0xff] %vm154, %v153
  // Predicated region
  $region14: #{attention_forward.3} parent=0 // pred_check
    %p157 = pneg %p11
  $region15: #{attention_forward.3} parent=0 // pred_check_branch
    %159 = sbr.rel (%p157) target = $region17
  $region16: #{attention_forward.3} parent=0 // pred_region
    %v160 = vld [vmem:[#allocation2] sm:$0xff]
    %v161 = vld [vmem:[#allocation2 + $0x8] sm:$0xff]
    %162 = vst.msk [vmem:[%s2] sm:$0xff] %vm154, %v160
    %163 = vst.msk [vmem:[%s2 + $0x8] sm:$0xff] %vm154, %v161
  $region17: #{attention_forward.3} parent=0 // pred_fallthru
    _
  // Predicated region
  $region18: #{attention_forward.3} parent=0 // pred_check
    _
  $region19: #{attention_forward.3} parent=0 // pred_check_branch
    %165 = sbr.rel (0) target = $region21
  $region20: #{attention_forward.3} parent=0 // pred_region
    _
  $region21: #{attention_forward.3} parent=0 // pred_fallthru
    _
  // Predicated region
  $region22: #{attention_forward.3} parent=0 // pred_check
    _
  $region23: #{attention_forward.3} parent=0 // pred_check_branch
    %167 = sbr.rel (0) target = $region25
  $region24: #{attention_forward.3} parent=0 // pred_region
    _
  $region25: #{attention_forward.3} parent=0 // pred_fallthru
    _

// kernel: attention_forward.5
$region0: #{attention_forward.5}
  #allocation0 [shape = 'u32[]', space=smem, size = 0x4, offset = 0x4, fixed_abs, tag = 'smem constant byte address 0x4 - core index']
  #allocation1 [shape = 'u32[144,128]{1,0:T(1,128)}', space=vmem, size = 0x12000, scoped, tag = 'internal scratch']
  #allocation2 [shape = 'f32[16,32]{1,0:T(8,128)}', space=vmem, size = 0x2000, scoped, tag = 'scratch operand']
  %s0 = inlined_call_operand.vmem [shape: f32[16,32], index: 0, kind: input, shape index: {}]
  %s1 = inlined_call_operand.vmem [shape: f32[32,32], index: 1, kind: input, shape index: {}]
  %s2 = inlined_call_operand.vmem [shape: f32[1,32], index: 2, kind: input, shape index: {}]
  %s3 = inlined_call_operand.hbm [shape: f32[16,32], index: 3, kind: output, shape index: {}]
  %s4 = sld [smem:[#allocation0]]
  $region30: #{attention_forward.5} parent=0
    _
  %s6 = ssub.s32 1, %s4
  %s7 = scalar_select 0, %s6, %s4
  $region1: #{attention_forward.5} parent=0
    #allocation3 [shape = 'u8[8192]{0}', space=vmem, size = 0x2000, scoped, tag = 'output window, operand 0, single buffered']
    #allocation4 [shape = 's32[1]{0}', space=sflag, size = 0x4, scoped, tag = 'scoped memory for attention_forward.5']
    %8 = vsyncpa [#allocation4], 0
    // Predicated region
    $region2: #{attention_forward.5} parent=1 // pred_check
      _
    $region3: #{attention_forward.5} parent=1 // pred_check_branch
      %10 = sbr.rel (0) target = $region5
    $region4: #{attention_forward.5} parent=1 // pred_region
      _
    $region5: #{attention_forward.5} parent=1 // pred_fallthru
      _
    // Predicated region
    $region6: #{attention_forward.5} parent=1 // pred_check
      _
    $region7: #{attention_forward.5} parent=1 // pred_check_branch
      %12 = sbr.rel (0) target = $region9
    $region8: #{attention_forward.5} parent=1 // pred_region
      _
    $region9: #{attention_forward.5} parent=1 // pred_fallthru
      _
    // Predicated region
    $region10: #{attention_forward.5} parent=1 // pred_check
      _
    $region11: #{attention_forward.5} parent=1 // pred_check_branch
      %14 = sbr.rel (0) target = $region13
    $region12: #{attention_forward.5} parent=1 // pred_region
      _
    $region13: #{attention_forward.5} parent=1 // pred_fallthru
      _
    %p15 = scmp.eq.s32.totalorder 0, 0
    // Predicated region
    $region14: #{attention_forward.5} parent=1 // pred_check
      %p16 = pneg %p15
    $region15: #{attention_forward.5} parent=1 // pred_check_branch
      %18 = sbr.rel (%p16) target = $region17
    $region16: #{attention_forward.5} parent=1 // pred_region
      %vm19 = vcmask 261120
      %20 = vst.msk [vmem:[#allocation2] sm:$0xff] %vm19, 0.0
      %21 = vst.msk [vmem:[#allocation2 + $0x8] sm:$0xff] %vm19, 0.0
    $region17: #{attention_forward.5} parent=1 // pred_fallthru
      _
    %v22 = vld [vmem:[#allocation2] sm:$0xff]
    %v23 = vld [vmem:[#allocation2 + $0x8] sm:$0xff]
    %v24 = vld [vmem:[%s0] sm:$0xff]
    %v25 = vld [vmem:[%s0 + $0x8] sm:$0xff]
    %v26 = vld [vmem:[%s1] sm:$0xff]
    %v27 = vld [vmem:[%s1 + $0x8] sm:$0xff]
    %v28 = vld [vmem:[%s1 + $0x10] sm:$0xff]
    %v29 = vld [vmem:[%s1 + $0x18] sm:$0xff]
    %vm30 = vcmask 261120
    %v32 = vsel %vm30, %v24, 0
    %v35 = vsel %vm30, %v25, 0
    %v38 = vsel %vm30, %v26, 0
    %v41 = vsel %vm30, %v27, 0
    %v44 = vsel %vm30, %v28, 0
    %v47 = vsel %vm30, %v29, 0
    %49 = vmatprep.subr.mxu0 0.0
    %50 = vmatpush1.xpose.msra.mxu0 %v38
    %51 = vmatprep.subr.mxu0 0.0
    %52 = vmatpush1.xpose.msra.mxu0 %v41
    %53 = vmatprep.subr.mxu0 0.0
    %54 = vmatpush1.xpose.msra.mxu0 %v44
    %55 = vmatprep.subr.mxu0 0.0
    %56 = vmatpush1.xpose.msra.mxu0 %v47
    %57 = vmatprep.subr.mxu0 0.0
    %58 = vmatpush1.xpose.msra.mxu0 0.0
    %59 = vmatprep.subr.mxu0 0.0
    %60 = vmatpush1.xpose.msra.mxu0 0.0
    %61 = vmatprep.subr.mxu0 0.0
    %62 = vmatpush1.xpose.msra.mxu0 0.0
    %63 = vmatprep.subr.mxu0 0.0
    %64 = vmatpush1.xpose.msra.mxu0 0.0
    %65 = vmatprep.subr.mxu0 0.0
    %66 = vmatpush1.xpose.msra.mxu0 0.0
    %67 = vmatprep.subr.mxu0 0.0
    %68 = vmatpush1.xpose.msra.mxu0 0.0
    %69 = vmatprep.subr.mxu0 0.0
    %70 = vmatpush1.xpose.msra.mxu0 0.0
    %71 = vmatprep.subr.mxu0 0.0
    %72 = vmatpush1.xpose.msra.mxu0 0.0
    %73 = vmatprep.subr.mxu0 0.0
    %74 = vmatpush1.xpose.msra.mxu0 0.0
    %75 = vmatprep.subr.mxu0 0.0
    %76 = vmatpush1.xpose.msra.mxu0 0.0
    %77 = vmatprep.subr.mxu0 0.0
    %78 = vmatpush1.xpose.msra.mxu0 0.0
    %79 = vmatprep.subr.mxu0 0.0
    %80 = vmatpush1.xpose.msra.mxu0 0.0
    %81 = vmatprep.subr.mxu0 0.0
    %82 = vmatpush1.xpose.msra.mxu0 0.0
    %83 = vmatprep.subr.mxu0 0.0
    %84 = vmatpush1.xpose.msra.mxu0 0.0
    %85 = vmatprep.subr.mxu0 0.0
    %86 = vmatpush1.xpose.msra.mxu0 0.0
    %87 = vmatprep.subr.mxu0 0.0
    %88 = vmatpush1.xpose.msra.mxu0 0.0
    %89 = vmatprep.subr.mxu0 0.0
    %90 = vmatpush1.xpose.msra.mxu0 0.0
    %91 = vmatprep.subr.mxu0 0.0
    %92 = vmatpush1.xpose.msra.mxu0 0.0
    %93 = vmatprep.subr.mxu0 0.0
    %94 = vmatpush1.xpose.msra.mxu0 0.0
    %95 = vmatprep.subr.mxu0 0.0
    %96 = vmatpush1.xpose.msra.mxu0 0.0
    %97 = vmatprep.subr.mxu0 0.0
    %98 = vmatpush1.xpose.msra.mxu0 0.0
    %99 = vmatprep.subr.mxu0 0.0
    %100 = vmatpush1.xpose.msra.mxu0 0.0
    %101 = vmatprep.subr.mxu0 0.0
    %102 = vmatpush1.xpose.msra.mxu0 0.0
    %103 = vmatprep.subr.mxu0 0.0
    %104 = vmatpush1.xpose.msra.mxu0 0.0
    %105 = vmatprep.subr.mxu0 0.0
    %106 = vmatpush1.xpose.msra.mxu0 0.0
    %107 = vmatprep.subr.mxu0 0.0
    %108 = vmatpush1.xpose.msra.mxu0 0.0
    %109 = vmatprep.subr.mxu0 0.0
    %110 = vmatpush1.xpose.msra.mxu0 0.0
    %111 = vmatprep.subr.mxu0 0.0
    %112 = vmatpush1.xpose.msra.mxu0 0.0
    %113 = vmatprep.mubr.f32.mxu0 0.0
    %114 = vmatmul.mubr.f32.gmra.mrb[0].mxu0 %v32
    %v115 = vpop.f32.mrb[0].mxu0
    %v116 = vadd.f32 0.0, %v115
    %v117 = vpop.f32.mrb[0].mxu0
    %118 = vmatprep.mubr.f32.mxu0 0.0
    %119 = vmatmul.mubr.f32.gmra.mrb[0].mxu0 %v35
    %v120 = vpop.f32.mrb[0].mxu0
    %v121 = vadd.f32 0.0, %v120
    %v122 = vpop.f32.mrb[0].mxu0
    %123 = vdwg.mxu0
    %v124 = vadd.f32 %v22, %v116
    %v125 = vadd.f32 %v23, %v121
    %126 = vst.msk [vmem:[#allocation2] sm:$0xff] %vm30, %v124
    %127 = vst.msk [vmem:[#allocation2 + $0x8] sm:$0xff] %vm30, %v125
    // Predicated region
    $region18: #{attention_forward.5} parent=1 // pred_check
      %p128 = pneg %p15
    $region19: #{attention_forward.5} parent=1 // pred_check_branch
      %130 = sbr.rel (%p128) target = $region21
    $region20: #{attention_forward.5} parent=1 // pred_region
      %v131 = vld [vmem:[#allocation2] sm:$0xff]
      %v132 = vld [vmem:[#allocation2 + $0x8] sm:$0xff]
      %v133 = vld [vmem:[%s2] sm:$0x1]
      %v135 = vlaneseq
      %v136 = vshrl.u32 %v135, 7
      %v137 = vsub.s32 0, %v136
      %v138 = vrot.slane %v133, %v137
      %v140 = vadd.f32 %v131, %v138
      %v141 = vadd.f32 %v132, %v138
      %142 = vst.msk [vmem:[#allocation3] sm:$0xff] %vm30, %v140
      %143 = vst.msk [vmem:[#allocation3 + $0x8] sm:$0xff] %vm30, %v141
    $region21: #{attention_forward.5} parent=1 // pred_fallthru
      _
    // Predicated region
    $region22: #{attention_forward.5} parent=1 // pred_check
      _
    $region23: #{attention_forward.5} parent=1 // pred_check_branch
      %145 = sbr.rel (0) target = $region25
    $region24: #{attention_forward.5} parent=1 // pred_region
      %s147 = ssub.s32 256, 256
      %148 = vsyncadd [#allocation4], %s147
      %s149 = sshll.u32 [#allocation3], 4
      %s150 = int_to_ptr.vmem [resolvable:$true] %s149
      %155 = dma.vmem_to_hbm [thread:$0]  %s150, 256, %s3, [#allocation4], 128, 128, 8
    $region25: #{attention_forward.5} parent=1 // pred_fallthru
      _
    // Predicated region
    $region26: #{attention_forward.5} parent=1 // pred_check
      _
    $region27: #{attention_forward.5} parent=1 // pred_check_branch
      %157 = sbr.rel (0) target = $region29
    $region28: #{attention_forward.5} parent=1 // pred_region
      %158 = dma.done [#allocation4], 256
    $region29: #{attention_forward.5} parent=1 // pred_fallthru
      _
    %159 = vsyncpa [#allocation4], 1

// kernel: attention_forward.4
$region0: #{attention_forward.4}
  #allocation0 [shape = 'u32[]', space=smem, size = 0x4, offset = 0x4, fixed_abs, tag = 'smem constant byte address 0x4 - core index']
  #allocation1 [shape = 'u32[144,128]{1,0:T(1,128)}', space=vmem, size = 0x12000, scoped, tag = 'internal scratch']
  %s0 = inlined_call_operand.vmem [shape: f32[2,8,3,8,4], index: 0, kind: input, shape index: {}, may-alias: {0,1,2}]
  %s1 = inlined_call_operand.vmem [shape: f32[2,8,3,8,4], index: 1, kind: input, shape index: {}, may-alias: {0,1,2}]
  %s2 = inlined_call_operand.vmem [shape: f32[2,8,3,8,4], index: 2, kind: input, shape index: {}, may-alias: {0,1,2}]
  %s3 = inlined_call_operand.vmem [shape: f32[2,8,32], index: 3, kind: output, shape index: {}]
  %s4 = sld [smem:[#allocation0]]
  $region159: #{attention_forward.4} parent=0
    _
  %s6 = ssub.s32 1, %s4
  %s7 = scalar_select 0, %s6, %s4
  $region1: #{attention_forward.4} parent=0
    #allocation2 [shape = 'u8[65536]{0}', space=vmem, size = 0x10000, scoped, tag = 'input window, operand 0']
    #allocation3 [shape = 'u8[65536]{0}', space=vmem, size = 0x10000, scoped, tag = 'input window, operand 1']
    #allocation4 [shape = 'u8[65536]{0}', space=vmem, size = 0x10000, scoped, tag = 'input window, operand 2']
    loop: start=0, step=1, limit=4
    $region2: #{attention_forward.4} parent=1 // loop_pre_header
      _
    $region3: #{attention_forward.4} parent=1 // loop_header
      %s9 = sphi 0, %s13
      %p10 = scmp.ge.s32.totalorder %s9, 4
      %s16 = sphi 0, %s28
      %s17 = sphi 0, %s24
      %s18 = sphi 0, %s16
      %s19 = sphi 0, %s17
      %s20 = sphi 0, %s18
      %s21 = sphi 0, %s19
      %s33 = sphi 0, %s35
      %s36 = sphi 0, %s33
      %s37 = sphi 0, %s36
      %s53 = sphi 0, %s37
      %s61 = sphi 0, %s63
      %s64 = sphi 0, %s61
      %s65 = sphi 0, %s64
      %s81 = sphi 0, %s65
      %s89 = sphi 0, %s91
      %s92 = sphi 0, %s89
      %s93 = sphi 0, %s92
      %s109 = sphi 0, %s93
      %s117 = sphi 0, %s119
      %s120 = sphi 0, %s117
      %s121 = sphi 0, %s120
      %s137 = sphi 0, %s121
    $region4: #{attention_forward.4} parent=1 // loop_header_branch
      %12 = sbr.rel (%p10) target = $region8
    $region5: #{attention_forward.4} parent=1 // loop_body
      %s14 = ssub.s32 %s9, 1
      %s15 = ssub.s32 %s9, 2
      %s22 = sadd.s32 1, %s17
      %p23 = scmp.ge.s32.totalorder %s22, 1
      %s24 = scalar_select %p23, 0, %s22
      %s25 = sadd.s32 1, %s16
      %s26 = scalar_select %p23, %s25, %s16
      %p27 = scmp.ge.s32.totalorder %s26, 2
      %s28 = scalar_select %p27, 0, %s26
      %s29 = ssub.s32 %s16, %s28
      %s30 = ssub.s32 %s17, %s24
      %s31 = sor.u32 %s29, %s30
      %p32 = scmp.eq.s32.totalorder %s31, 0
      %s34 = sadd.s32 %s33, 1
      %s35 = scalar_select %p32, %s33, %s34
      %p38 = pneg %p32
      %p39 = scmp.eq.s32.totalorder %s9, 1
      %p40 = por %p38, %p39
      %p41 = scmp.ne.s32.totalorder %s33, %s36
      %p42 = scmp.eq.s32.totalorder %s9, 0
      %p43 = por %p41, %p42
      %p44 = scmp.ne.s32.totalorder %s33, %s36
      %p45 = scmp.eq.s32.totalorder %s14, 1
      %p46 = por %p44, %p45
      %p47 = scmp.ne.s32.totalorder %s36, %s37
      %p48 = scmp.eq.s32.totalorder %s14, 0
      %p49 = por %p47, %p48
      %p50 = scmp.ne.s32.totalorder %s36, %s37
      %p51 = scmp.eq.s32.totalorder %s15, 1
      %p52 = por %p50, %p51
      %p54 = scmp.ne.s32.totalorder %s37, %s53
      %p55 = scmp.eq.s32.totalorder %s15, 0
      %p56 = por %p54, %p55
      %s57 = ssub.s32 %s16, %s28
      %s58 = ssub.s32 %s17, %s24
      %s59 = sor.u32 %s57, %s58
      %p60 = scmp.eq.s32.totalorder %s59, 0
      %s62 = sadd.s32 %s61, 1
      %s63 = scalar_select %p60, %s61, %s62
      %p66 = pneg %p60
      %p67 = scmp.eq.s32.totalorder %s9, 1
      %p68 = por %p66, %p67
      %p69 = scmp.ne.s32.totalorder %s61, %s64
      %p70 = scmp.eq.s32.totalorder %s9, 0
      %p71 = por %p69, %p70
      %p72 = scmp.ne.s32.totalorder %s61, %s64
      %p73 = scmp.eq.s32.totalorder %s14, 1
      %p74 = por %p72, %p73
      %p75 = scmp.ne.s32.totalorder %s64, %s65
      %p76 = scmp.eq.s32.totalorder %s14, 0
      %p77 = por %p75, %p76
      %p78 = scmp.ne.s32.totalorder %s64, %s65
      %p79 = scmp.eq.s32.totalorder %s15, 1
      %p80 = por %p78, %p79
      %p82 = scmp.ne.s32.totalorder %s65, %s81
      %p83 = scmp.eq.s32.totalorder %s15, 0
      %p84 = por %p82, %p83
      %s85 = ssub.s32 %s16, %s28
      %s86 = ssub.s32 %s17, %s24
      %s87 = sor.u32 %s85, %s86
      %p88 = scmp.eq.s32.totalorder %s87, 0
      %s90 = sadd.s32 %s89, 1
      %s91 = scalar_select %p88, %s89, %s90
      %p94 = pneg %p88
      %p95 = scmp.eq.s32.totalorder %s9, 1
      %p96 = por %p94, %p95
      %p97 = scmp.ne.s32.totalorder %s89, %s92
      %p98 = scmp.eq.s32.totalorder %s9, 0
      %p99 = por %p97, %p98
      %p100 = scmp.ne.s32.totalorder %s89, %s92
      %p101 = scmp.eq.s32.totalorder %s14, 1
      %p102 = por %p100, %p101
      %p103 = scmp.ne.s32.totalorder %s92, %s93
      %p104 = scmp.eq.s32.totalorder %s14, 0
      %p105 = por %p103, %p104
      %p106 = scmp.ne.s32.totalorder %s92, %s93
      %p107 = scmp.eq.s32.totalorder %s15, 1
      %p108 = por %p106, %p107
      %p110 = scmp.ne.s32.totalorder %s93, %s109
      %p111 = scmp.eq.s32.totalorder %s15, 0
      %p112 = por %p110, %p111
      %s113 = ssub.s32 %s16, %s28
      %s114 = ssub.s32 %s17, %s24
      %s115 = sor.u32 %s113, %s114
      %p116 = scmp.eq.s32.totalorder %s115, 0
      %s118 = sadd.s32 %s117, 1
      %s119 = scalar_select %p116, %s117, %s118
      %p122 = pneg %p116
      %p123 = scmp.eq.s32.totalorder %s9, 1
      %p124 = por %p122, %p123
      %p125 = scmp.ne.s32.totalorder %s117, %s120
      %p126 = scmp.eq.s32.totalorder %s9, 0
      %p127 = por %p125, %p126
      %p128 = scmp.ne.s32.totalorder %s117, %s120
      %p129 = scmp.eq.s32.totalorder %s14, 1
      %p130 = por %p128, %p129
      %p131 = scmp.ne.s32.totalorder %s120, %s121
      %p132 = scmp.eq.s32.totalorder %s14, 0
      %p133 = por %p131, %p132
      %p134 = scmp.ne.s32.totalorder %s120, %s121
      %p135 = scmp.eq.s32.totalorder %s15, 1
      %p136 = por %p134, %p135
      %p138 = scmp.ne.s32.totalorder %s121, %s137
      %p139 = scmp.eq.s32.totalorder %s15, 0
      %p140 = por %p138, %p139
      %p141 = scmp.le.s32.totalorder 1, %s9
      %p142 = scmp.lt.s32.totalorder %s9, 3
      %p143 = pnand %p141, %p142
      %p144 = pneg %p143
      // Predicated region
      $region9: #{attention_forward.4} parent=5 // pred_check
        _
      $region10: #{attention_forward.4} parent=5 // pred_check_branch
        %146 = sbr.rel (%p143) target = $region12
      $region11: #{attention_forward.4} parent=5 // pred_region
        %s147 = ssub.s32 %s9, 1
      $region12: #{attention_forward.4} parent=5 // pred_fallthru
        _
      %p148 = scmp.lt.s32.totalorder %s9, 2
      // Predicated region
      $region13: #{attention_forward.4} parent=5 // pred_check
        %p149 = pneg %p148
      $region14: #{attention_forward.4} parent=5 // pred_check_branch
        %151 = sbr.rel (%p149) target = $region16
      $region15: #{attention_forward.4} parent=5 // pred_region
        // Predicated region
        $region17: #{attention_forward.4} parent=15 // pred_check
          %p152 = pneg %p43
        $region18: #{attention_forward.4} parent=15 // pred_check_branch
          %154 = sbr.rel (%p152) target = $region20
        $region19: #{attention_forward.4} parent=15 // pred_region
          %s155 = sand.u32 %s33, 1
          %s156 = sand.u32 %s33, 1
          %s157 = smul.addr %s156, 64
          %s158 = scalar_lea.vmem [#allocation2], %s157
          %s159 = smul.addr %s16, 24
          %s160 = sadd.s32 %s17, %s159
          %s161 = smul.addr %s160, 8
          %s162 = scalar_lea.vmem %s0, %s161
          // Predicated region
          $region21: #{attention_forward.4} parent=19 // pred_check
            _
          $region22: #{attention_forward.4} parent=19 // pred_check_branch
            %164 = sbr.rel (0) target = $region24
          $region23: #{attention_forward.4} parent=19 // pred_region
            // Predicated region
            $region25: #{attention_forward.4} parent=23 // pred_check
              _
            $region26: #{attention_forward.4} parent=23 // pred_check_branch
              %166 = sbr.rel (0) target = $region28
            $region27: #{attention_forward.4} parent=23 // pred_region
              // Predicated region
              $region40: #{attention_forward.4} parent=27 // pred_check
                _
              $region41: #{attention_forward.4} parent=27 // pred_check_branch
                %195 = sbr.rel (0) target = $region43
              $region42: #{attention_forward.4} parent=27 // pred_region
                loop: start=0, step=1, limit=1
                $region44: #{attention_forward.4} parent=42 // loop_pre_header
                  _
                $region45: #{attention_forward.4} parent=42 // loop_header
                  %s197 = sphi 0, %s201
                  %p198 = scmp.ge.s32.totalorder %s197, 1
                  %s202 = sphi %s162, %s162
                  %s203 = sphi %s158, %s158
                $region46: #{attention_forward.4} parent=42 // loop_header_branch
                  %200 = sbr.rel (%p198) target = $region50
                $region47: #{attention_forward.4} parent=42 // loop_body
                  %v204 = vld [vmem:[%s202] sm:$0xff]
                  %205 = vst [vmem:[%s203] sm:$0xff] %v204
                  %v206 = vld [vmem:[%s202 + $0x18] sm:$0xff]
                  %207 = vst [vmem:[%s203 + $0x8] sm:$0xff] %v206
                  %v208 = vld [vmem:[%s202 + $0x30] sm:$0xff]
                  %209 = vst [vmem:[%s203 + $0x10] sm:$0xff] %v208
                  %v210 = vld [vmem:[%s202 + $0x48] sm:$0xff]
                  %211 = vst [vmem:[%s203 + $0x18] sm:$0xff] %v210
                  %v212 = vld [vmem:[%s202 + $0x60] sm:$0xff]
                  %213 = vst [vmem:[%s203 + $0x20] sm:$0xff] %v212
                  %v214 = vld [vmem:[%s202 + $0x78] sm:$0xff]
                  %215 = vst [vmem:[%s203 + $0x28] sm:$0xff] %v214
                  %v216 = vld [vmem:[%s202 + $0x90] sm:$0xff]
                  %217 = vst [vmem:[%s203 + $0x30] sm:$0xff] %v216
                  %v218 = vld [vmem:[%s202 + $0xa8] sm:$0xff]
                  %219 = vst [vmem:[%s203 + $0x38] sm:$0xff] %v218
                $region48: #{attention_forward.4} parent=42 // loop_footer
                  %s201 = sadd.s32 1, %s197
                $region49: #{attention_forward.4} parent=42 // loop_footer_branch
                  %196 = sbr.rel target = $region45
                $region50: #{attention_forward.4} parent=42 // loop_exit
                  _
              $region43: #{attention_forward.4} parent=27 // pred_fallthru
                _
              // Predicated region
              $region51: #{attention_forward.4} parent=27 // pred_check
                _
              $region52: #{attention_forward.4} parent=27 // pred_check_branch
                %221 = sbr.rel target = $region54
              $region53: #{attention_forward.4} parent=27 // pred_region
                _
              $region54: #{attention_forward.4} parent=27 // pred_fallthru
                _
            $region28: #{attention_forward.4} parent=23 // pred_fallthru
              _
            // Predicated region
            $region29: #{attention_forward.4} parent=23 // pred_check
              _
            $region30: #{attention_forward.4} parent=23 // pred_check_branch
              %168 = sbr.rel target = $region32
            $region31: #{attention_forward.4} parent=23 // pred_region
              loop: start=0, step=1, limit=1
              $region33: #{attention_forward.4} parent=31 // loop_pre_header
                _
              $region34: #{attention_forward.4} parent=31 // loop_header
                %s171 = sphi 0, %s175
                %p172 = scmp.ge.s32.totalorder %s171, 1
                %s176 = sphi %s162, %s162
                %s177 = sphi %s158, %s158
              $region35: #{attention_forward.4} parent=31 // loop_header_branch
                %174 = sbr.rel (%p172) target = $region39
              $region36: #{attention_forward.4} parent=31 // loop_body
                %v178 = vld [vmem:[%s176] sm:$0xff]
                %179 = vst [vmem:[%s177] sm:$0xff] %v178
                %v180 = vld [vmem:[%s176 + $0x18] sm:$0xff]
                %181 = vst [vmem:[%s177 + $0x8] sm:$0xff] %v180
                %v182 = vld [vmem:[%s176 + $0x30] sm:$0xff]
                %183 = vst [vmem:[%s177 + $0x10] sm:$0xff] %v182
                %v184 = vld [vmem:[%s176 + $0x48] sm:$0xff]
                %185 = vst [vmem:[%s177 + $0x18] sm:$0xff] %v184
                %v186 = vld [vmem:[%s176 + $0x60] sm:$0xff]
                %187 = vst [vmem:[%s177 + $0x20] sm:$0xff] %v186
                %v188 = vld [vmem:[%s176 + $0x78] sm:$0xff]
                %189 = vst [vmem:[%s177 + $0x28] sm:$0xff] %v188
                %v190 = vld [vmem:[%s176 + $0x90] sm:$0xff]
                %191 = vst [vmem:[%s177 + $0x30] sm:$0xff] %v190
                %v192 = vld [vmem:[%s176 + $0xa8] sm:$0xff]
                %193 = vst [vmem:[%s177 + $0x38] sm:$0xff] %v192
              $region37: #{attention_forward.4} parent=31 // loop_footer
                %s175 = sadd.s32 1, %s171
              $region38: #{attention_forward.4} parent=31 // loop_footer_branch
                %170 = sbr.rel target = $region34
              $region39: #{attention_forward.4} parent=31 // loop_exit
                _
            $region32: #{attention_forward.4} parent=23 // pred_fallthru
              _
          $region24: #{attention_forward.4} parent=19 // pred_fallthru
            _
          %222 = vnop
        $region20: #{attention_forward.4} parent=15 // pred_fallthru
          _
        // Predicated region
        $region55: #{attention_forward.4} parent=15 // pred_check
          %p223 = pneg %p71
        $region56: #{attention_forward.4} parent=15 // pred_check_branch
          %225 = sbr.rel (%p223) target = $region58
        $region57: #{attention_forward.4} parent=15 // pred_region
          %s226 = sand.u32 %s61, 1
          %s227 = sand.u32 %s61, 1
          %s228 = smul.addr %s227, 64
          %s229 = scalar_lea.vmem [#allocation3], %s228
          %s230 = sadd.s32 %s17, 1
          %s231 = smul.addr %s16, 24
          %s232 = sadd.s32 %s230, %s231
          %s233 = smul.addr %s232, 8
          %s234 = scalar_lea.vmem %s1, %s233
          // Predicated region
          $region59: #{attention_forward.4} parent=57 // pred_check
            _
          $region60: #{attention_forward.4} parent=57 // pred_check_branch
            %236 = sbr.rel (0) target = $region62
          $region61: #{attention_forward.4} parent=57 // pred_region
            // Predicated region
            $region63: #{attention_forward.4} parent=61 // pred_check
              _
            $region64: #{attention_forward.4} parent=61 // pred_check_branch
              %238 = sbr.rel (0) target = $region66
            $region65: #{attention_forward.4} parent=61 // pred_region
              // Predicated region
              $region78: #{attention_forward.4} parent=65 // pred_check
                _
              $region79: #{attention_forward.4} parent=65 // pred_check_branch
                %267 = sbr.rel (0) target = $region81
              $region80: #{attention_forward.4} parent=65 // pred_region
                loop: start=0, step=1, limit=1
                $region82: #{attention_forward.4} parent=80 // loop_pre_header
                  _
                $region83: #{attention_forward.4} parent=80 // loop_header
                  %s269 = sphi 0, %s273
                  %p270 = scmp.ge.s32.totalorder %s269, 1
                  %s274 = sphi %s234, %s234
                  %s275 = sphi %s229, %s229
                $region84: #{attention_forward.4} parent=80 // loop_header_branch
                  %272 = sbr.rel (%p270) target = $region88
                $region85: #{attention_forward.4} parent=80 // loop_body
                  %v276 = vld [vmem:[%s274] sm:$0xff]
                  %277 = vst [vmem:[%s275] sm:$0xff] %v276
                  %v278 = vld [vmem:[%s274 + $0x18] sm:$0xff]
                  %279 = vst [vmem:[%s275 + $0x8] sm:$0xff] %v278
                  %v280 = vld [vmem:[%s274 + $0x30] sm:$0xff]
                  %281 = vst [vmem:[%s275 + $0x10] sm:$0xff] %v280
                  %v282 = vld [vmem:[%s274 + $0x48] sm:$0xff]
                  %283 = vst [vmem:[%s275 + $0x18] sm:$0xff] %v282
                  %v284 = vld [vmem:[%s274 + $0x60] sm:$0xff]
                  %285 = vst [vmem:[%s275 + $0x20] sm:$0xff] %v284
                  %v286 = vld [vmem:[%s274 + $0x78] sm:$0xff]
                  %287 = vst [vmem:[%s275 + $0x28] sm:$0xff] %v286
                  %v288 = vld [vmem:[%s274 + $0x90] sm:$0xff]
                  %289 = vst [vmem:[%s275 + $0x30] sm:$0xff] %v288
                  %v290 = vld [vmem:[%s274 + $0xa8] sm:$0xff]
                  %291 = vst [vmem:[%s275 + $0x38] sm:$0xff] %v290
                $region86: #{attention_forward.4} parent=80 // loop_footer
                  %s273 = sadd.s32 1, %s269
                $region87: #{attention_forward.4} parent=80 // loop_footer_branch
                  %268 = sbr.rel target = $region83
                $region88: #{attention_forward.4} parent=80 // loop_exit
                  _
              $region81: #{attention_forward.4} parent=65 // pred_fallthru
                _
              // Predicated region
              $region89: #{attention_forward.4} parent=65 // pred_check
                _
              $region90: #{attention_forward.4} parent=65 // pred_check_branch
                %293 = sbr.rel target = $region92
              $region91: #{attention_forward.4} parent=65 // pred_region
                _
              $region92: #{attention_forward.4} parent=65 // pred_fallthru
                _
            $region66: #{attention_forward.4} parent=61 // pred_fallthru
              _
            // Predicated region
            $region67: #{attention_forward.4} parent=61 // pred_check
              _
            $region68: #{attention_forward.4} parent=61 // pred_check_branch
              %240 = sbr.rel target = $region70
            $region69: #{attention_forward.4} parent=61 // pred_region
              loop: start=0, step=1, limit=1
              $region71: #{attention_forward.4} parent=69 // loop_pre_header
                _
              $region72: #{attention_forward.4} parent=69 // loop_header
                %s243 = sphi 0, %s247
                %p244 = scmp.ge.s32.totalorder %s243, 1
                %s248 = sphi %s234, %s234
                %s249 = sphi %s229, %s229
              $region73: #{attention_forward.4} parent=69 // loop_header_branch
                %246 = sbr.rel (%p244) target = $region77
              $region74: #{attention_forward.4} parent=69 // loop_body
                %v250 = vld [vmem:[%s248] sm:$0xff]
                %251 = vst [vmem:[%s249] sm:$0xff] %v250
                %v252 = vld [vmem:[%s248 + $0x18] sm:$0xff]
                %253 = vst [vmem:[%s249 + $0x8] sm:$0xff] %v252
                %v254 = vld [vmem:[%s248 + $0x30] sm:$0xff]
                %255 = vst [vmem:[%s249 + $0x10] sm:$0xff] %v254
                %v256 = vld [vmem:[%s248 + $0x48] sm:$0xff]
                %257 = vst [vmem:[%s249 + $0x18] sm:$0xff] %v256
                %v258 = vld [vmem:[%s248 + $0x60] sm:$0xff]
                %259 = vst [vmem:[%s249 + $0x20] sm:$0xff] %v258
                %v260 = vld [vmem:[%s248 + $0x78] sm:$0xff]
                %261 = vst [vmem:[%s249 + $0x28] sm:$0xff] %v260
                %v262 = vld [vmem:[%s248 + $0x90] sm:$0xff]
                %263 = vst [vmem:[%s249 + $0x30] sm:$0xff] %v262
                %v264 = vld [vmem:[%s248 + $0xa8] sm:$0xff]
                %265 = vst [vmem:[%s249 + $0x38] sm:$0xff] %v264
              $region75: #{attention_forward.4} parent=69 // loop_footer
                %s247 = sadd.s32 1, %s243
              $region76: #{attention_forward.4} parent=69 // loop_footer_branch
                %242 = sbr.rel target = $region72
              $region77: #{attention_forward.4} parent=69 // loop_exit
                _
            $region70: #{attention_forward.4} parent=61 // pred_fallthru
              _
          $region62: #{attention_forward.4} parent=57 // pred_fallthru
            _
          %294 = vnop
        $region58: #{attention_forward.4} parent=15 // pred_fallthru
          _
        // Predicated region
        $region93: #{attention_forward.4} parent=15 // pred_check
          %p295 = pneg %p99
        $region94: #{attention_forward.4} parent=15 // pred_check_branch
          %297 = sbr.rel (%p295) target = $region96
        $region95: #{attention_forward.4} parent=15 // pred_region
          %s298 = sand.u32 %s89, 1
          %s299 = sand.u32 %s89, 1
          %s300 = smul.addr %s299, 64
          %s301 = scalar_lea.vmem [#allocation4], %s300
          %s302 = sadd.s32 %s17, 2
          %s303 = smul.addr %s16, 24
          %s304 = sadd.s32 %s302, %s303
          %s305 = smul.addr %s304, 8
          %s306 = scalar_lea.vmem %s2, %s305
          // Predicated region
          $region97: #{attention_forward.4} parent=95 // pred_check
            _
          $region98: #{attention_forward.4} parent=95 // pred_check_branch
            %308 = sbr.rel (0) target = $region100
          $region99: #{attention_forward.4} parent=95 // pred_region
            // Predicated region
            $region101: #{attention_forward.4} parent=99 // pred_check
              _
            $region102: #{attention_forward.4} parent=99 // pred_check_branch
              %310 = sbr.rel (0) target = $region104
            $region103: #{attention_forward.4} parent=99 // pred_region
              // Predicated region
              $region116: #{attention_forward.4} parent=103 // pred_check
                _
              $region117: #{attention_forward.4} parent=103 // pred_check_branch
                %339 = sbr.rel (0) target = $region119
              $region118: #{attention_forward.4} parent=103 // pred_region
                loop: start=0, step=1, limit=1
                $region120: #{attention_forward.4} parent=118 // loop_pre_header
                  _
                $region121: #{attention_forward.4} parent=118 // loop_header
                  %s341 = sphi 0, %s345
                  %p342 = scmp.ge.s32.totalorder %s341, 1
                  %s346 = sphi %s306, %s306
                  %s347 = sphi %s301, %s301
                $region122: #{attention_forward.4} parent=118 // loop_header_branch
                  %344 = sbr.rel (%p342) target = $region126
                $region123: #{attention_forward.4} parent=118 // loop_body
                  %v348 = vld [vmem:[%s346] sm:$0xff]
                  %349 = vst [vmem:[%s347] sm:$0xff] %v348
                  %v350 = vld [vmem:[%s346 + $0x18] sm:$0xff]
                  %351 = vst [vmem:[%s347 + $0x8] sm:$0xff] %v350
                  %v352 = vld [vmem:[%s346 + $0x30] sm:$0xff]
                  %353 = vst [vmem:[%s347 + $0x10] sm:$0xff] %v352
                  %v354 = vld [vmem:[%s346 + $0x48] sm:$0xff]
                  %355 = vst [vmem:[%s347 + $0x18] sm:$0xff] %v354
                  %v356 = vld [vmem:[%s346 + $0x60] sm:$0xff]
                  %357 = vst [vmem:[%s347 + $0x20] sm:$0xff] %v356
                  %v358 = vld [vmem:[%s346 + $0x78] sm:$0xff]
                  %359 = vst [vmem:[%s347 + $0x28] sm:$0xff] %v358
                  %v360 = vld [vmem:[%s346 + $0x90] sm:$0xff]
                  %361 = vst [vmem:[%s347 + $0x30] sm:$0xff] %v360
                  %v362 = vld [vmem:[%s346 + $0xa8] sm:$0xff]
                  %363 = vst [vmem:[%s347 + $0x38] sm:$0xff] %v362
                $region124: #{attention_forward.4} parent=118 // loop_footer
                  %s345 = sadd.s32 1, %s341
                $region125: #{attention_forward.4} parent=118 // loop_footer_branch
                  %340 = sbr.rel target = $region121
                $region126: #{attention_forward.4} parent=118 // loop_exit
                  _
              $region119: #{attention_forward.4} parent=103 // pred_fallthru
                _
              // Predicated region
              $region127: #{attention_forward.4} parent=103 // pred_check
                _
              $region128: #{attention_forward.4} parent=103 // pred_check_branch
                %365 = sbr.rel target = $region130
              $region129: #{attention_forward.4} parent=103 // pred_region
                _
              $region130: #{attention_forward.4} parent=103 // pred_fallthru
                _
            $region104: #{attention_forward.4} parent=99 // pred_fallthru
              _
            // Predicated region
            $region105: #{attention_forward.4} parent=99 // pred_check
              _
            $region106: #{attention_forward.4} parent=99 // pred_check_branch
              %312 = sbr.rel target = $region108
            $region107: #{attention_forward.4} parent=99 // pred_region
              loop: start=0, step=1, limit=1
              $region109: #{attention_forward.4} parent=107 // loop_pre_header
                _
              $region110: #{attention_forward.4} parent=107 // loop_header
                %s315 = sphi 0, %s319
                %p316 = scmp.ge.s32.totalorder %s315, 1
                %s320 = sphi %s306, %s306
                %s321 = sphi %s301, %s301
              $region111: #{attention_forward.4} parent=107 // loop_header_branch
                %318 = sbr.rel (%p316) target = $region115
              $region112: #{attention_forward.4} parent=107 // loop_body
                %v322 = vld [vmem:[%s320] sm:$0xff]
                %323 = vst [vmem:[%s321] sm:$0xff] %v322
                %v324 = vld [vmem:[%s320 + $0x18] sm:$0xff]
                %325 = vst [vmem:[%s321 + $0x8] sm:$0xff] %v324
                %v326 = vld [vmem:[%s320 + $0x30] sm:$0xff]
                %327 = vst [vmem:[%s321 + $0x10] sm:$0xff] %v326
                %v328 = vld [vmem:[%s320 + $0x48] sm:$0xff]
                %329 = vst [vmem:[%s321 + $0x18] sm:$0xff] %v328
                %v330 = vld [vmem:[%s320 + $0x60] sm:$0xff]
                %331 = vst [vmem:[%s321 + $0x20] sm:$0xff] %v330
                %v332 = vld [vmem:[%s320 + $0x78] sm:$0xff]
                %333 = vst [vmem:[%s321 + $0x28] sm:$0xff] %v332
                %v334 = vld [vmem:[%s320 + $0x90] sm:$0xff]
                %335 = vst [vmem:[%s321 + $0x30] sm:$0xff] %v334
                %v336 = vld [vmem:[%s320 + $0xa8] sm:$0xff]
                %337 = vst [vmem:[%s321 + $0x38] sm:$0xff] %v336
              $region113: #{attention_forward.4} parent=107 // loop_footer
                %s319 = sadd.s32 1, %s315
              $region114: #{attention_forward.4} parent=107 // loop_footer_branch
                %314 = sbr.rel target = $region110
              $region115: #{attention_forward.4} parent=107 // loop_exit
                _
            $region108: #{attention_forward.4} parent=99 // pred_fallthru
              _
          $region100: #{attention_forward.4} parent=95 // pred_fallthru
            _
          %366 = vnop
        $region96: #{attention_forward.4} parent=15 // pred_fallthru
          _
      $region16: #{attention_forward.4} parent=5 // pred_fallthru
        _
      %p367 = scmp.le.s32.totalorder 1, %s9
      %p368 = scmp.lt.s32.totalorder %s9, 3
      %p369 = pnand %p367, %p368
      %p370 = pneg %p369
      // Predicated region
      $region131: #{attention_forward.4} parent=5 // pred_check
        _
      $region132: #{attention_forward.4} parent=5 // pred_check_branch
        %372 = sbr.rel (%p369) target = $region134
      $region133: #{attention_forward.4} parent=5 // pred_region
        %s373 = ssub.s32 %s9, 1
        %s374 = sand.u32 %s36, 1
        %s375 = sand.u32 %s36, 1
        %s376 = smul.addr %s375, 64
        %s377 = scalar_lea.vmem [#allocation2], %s376
        // Predicated region
        $region135: #{attention_forward.4} parent=133 // pred_check
          %p378 = pneg %p49
        $region136: #{attention_forward.4} parent=133 // pred_check_branch
          %380 = sbr.rel (%p378) target = $region138
        $region137: #{attention_forward.4} parent=133 // pred_region
          _
        $region138: #{attention_forward.4} parent=133 // pred_fallthru
          _
        %s381 = sand.u32 %s64, 1
        %s382 = sand.u32 %s64, 1
        %s383 = smul.addr %s382, 64
        %s384 = scalar_lea.vmem [#allocation3], %s383
        // Predicated region
        $region139: #{attention_forward.4} parent=133 // pred_check
          %p385 = pneg %p77
        $region140: #{attention_forward.4} parent=133 // pred_check_branch
          %387 = sbr.rel (%p385) target = $region142
        $region141: #{attention_forward.4} parent=133 // pred_region
          _
        $region142: #{attention_forward.4} parent=133 // pred_fallthru
          _
        %s388 = sand.u32 %s92, 1
        %s389 = sand.u32 %s92, 1
        %s390 = smul.addr %s389, 64
        %s391 = scalar_lea.vmem [#allocation4], %s390
        // Predicated region
        $region143: #{attention_forward.4} parent=133 // pred_check
          %p392 = pneg %p105
        $region144: #{attention_forward.4} parent=133 // pred_check_branch
          %394 = sbr.rel (%p392) target = $region146
        $region145: #{attention_forward.4} parent=133 // pred_region
          _
        $region146: #{attention_forward.4} parent=133 // pred_fallthru
          _
        %s395 = sand.u32 %s36, 1
        %s396 = sand.u32 %s36, 1
        %s397 = smul.addr %s396, 64
        %s398 = scalar_lea.vmem [#allocation2], %s397
        %p399 = pneg %p49
        %p400 = pneg %p46
        %s401 = sand.u32 %s64, 1
        %s402 = sand.u32 %s64, 1
        %s403 = smul.addr %s402, 64
        %s404 = scalar_lea.vmem [#allocation3], %s403
        %p405 = pneg %p77
        %p406 = pneg %p74
        %s407 = sand.u32 %s92, 1
        %s408 = sand.u32 %s92, 1
        %s409 = smul.addr %s408, 64
        %s410 = scalar_lea.vmem [#allocation4], %s409
        %p411 = pneg %p105
        %p412 = pneg %p102
        %p413 = pneg %p133
        %p414 = pneg %p130
        %p415 = scmp.lt.s32.totalorder %s18, 1
        %s416 = scalar_select %p415, %s18, 1
        %p417 = scmp.lt.s32.totalorder %s19, 0
        %s418 = scalar_select %p417, %s19, 0
        %s419 = sadd.s32 %s418, %s416
        %s420 = smul.addr %s419, 8
        %s421 = scalar_lea.vmem %s3, %s420
        %p422 = scmp.lt.s32.totalorder %s18, 1
        %s423 = scalar_select %p422, %s18, 1
        %p424 = scmp.lt.s32.totalorder %s19, 0
        %s425 = scalar_select %p424, %s19, 0
        %s426 = sadd.s32 %s425, %s423
        %s427 = smul.addr %s426, 8
        %s428 = scalar_lea.vmem %s3, %s427
        %v429 = vld [vmem:[%s377] sm:$0xff]
        %v430 = vld [vmem:[%s377 + $0x8] sm:$0xff]
        %v431 = vld [vmem:[%s377 + $0x10] sm:$0xff]
        %v432 = vld [vmem:[%s377 + $0x18] sm:$0xff]
        %v433 = vld [vmem:[%s377 + $0x20] sm:$0xff]
        %v434 = vld [vmem:[%s377 + $0x28] sm:$0xff]
        %v435 = vld [vmem:[%s377 + $0x30] sm:$0xff]
        %v436 = vld [vmem:[%s377 + $0x38] sm:$0xff]
        %v437 = vcombine.low %v429, %v431
        %v438 = vcombine.high %v429, %v431
        %v440 = vunpack.c.l.s4 1983009808
        %v441 = vunpack.c.0.s8 %v440
        %v442 = vlaneseq
        %v443 = vshrl.u32 %v442, 7
        %v444 = vsub.s32 %v441, %v443
        %v445 = vrot.slane %v437, %v444
        %v447 = vunpack.c.l.s4 1983009808
        %v448 = vunpack.c.0.s8 %v447
        %v449 = vlaneseq
        %v450 = vshrl.u32 %v449, 7
        %v451 = vsub.s32 %v448, %v450
        %v452 = vrot.slane %v438, %v451
        %v453 = vcombine.low %v430, %v432
        %v454 = vcombine.high %v430, %v432
        %v456 = vunpack.c.l.s4 1983009808
        %v457 = vunpack.c.0.s8 %v456
        %v458 = vlaneseq
        %v459 = vshrl.u32 %v458, 7
        %v460 = vsub.s32 %v457, %v459
        %v461 = vrot.slane %v453, %v460
        %v463 = vunpack.c.l.s4 1983009808
        %v464 = vunpack.c.0.s8 %v463
        %v465 = vlaneseq
        %v466 = vshrl.u32 %v465, 7
        %v467 = vsub.s32 %v464, %v466
        %v468 = vrot.slane %v454, %v467
        %v469 = vcombine.low %v433, %v435
        %v470 = vcombine.high %v433, %v435
        %v472 = vunpack.c.l.s4 1983009808
        %v473 = vunpack.c.0.s8 %v472
        %v474 = vlaneseq
        %v475 = vshrl.u32 %v474, 7
        %v476 = vsub.s32 %v473, %v475
        %v477 = vrot.slane %v469, %v476
        %v479 = vunpack.c.l.s4 1983009808
        %v480 = vunpack.c.0.s8 %v479
        %v481 = vlaneseq
        %v482 = vshrl.u32 %v481, 7
        %v483 = vsub.s32 %v480, %v482
        %v484 = vrot.slane %v470, %v483
        %v485 = vcombine.low %v434, %v436
        %v486 = vcombine.high %v434, %v436
        %v488 = vunpack.c.l.s4 1983009808
        %v489 = vunpack.c.0.s8 %v488
        %v490 = vlaneseq
        %v491 = vshrl.u32 %v490, 7
        %v492 = vsub.s32 %v489, %v491
        %v493 = vrot.slane %v485, %v492
        %v495 = vunpack.c.l.s4 1983009808
        %v496 = vunpack.c.0.s8 %v495
        %v497 = vlaneseq
        %v498 = vshrl.u32 %v497, 7
        %v499 = vsub.s32 %v496, %v498
        %v500 = vrot.slane %v486, %v499
        %v501 = vcombine.low %v445, %v461
        %v502 = vcombine.high %v445, %v461
        %v504 = vunpack.c.l.s4 1934713408
        %v505 = vunpack.c.0.s8 %v504
        %v506 = vlaneseq
        %v507 = vshrl.u32 %v506, 7
        %v508 = vsub.s32 %v505, %v507
        %v509 = vrot.slane %v501, %v508
        %v511 = vunpack.c.l.s4 1934713408
        %v512 = vunpack.c.0.s8 %v511
        %v513 = vlaneseq
        %v514 = vshrl.u32 %v513, 7
        %v515 = vsub.s32 %v512, %v514
        %v516 = vrot.slane %v502, %v515
        %v517 = vcombine.low %v452, %v468
        %v518 = vcombine.high %v452, %v468
        %v520 = vunpack.c.l.s4 1934713408
        %v521 = vunpack.c.0.s8 %v520
        %v522 = vlaneseq
        %v523 = vshrl.u32 %v522, 7
        %v524 = vsub.s32 %v521, %v523
        %v525 = vrot.slane %v517, %v524
        %v527 = vunpack.c.l.s4 1934713408
        %v528 = vunpack.c.0.s8 %v527
        %v529 = vlaneseq
        %v530 = vshrl.u32 %v529, 7
        %v531 = vsub.s32 %v528, %v530
        %v532 = vrot.slane %v518, %v531
        %v533 = vcombine.low %v477, %v493
        %v534 = vcombine.high %v477, %v493
        %v536 = vunpack.c.l.s4 1934713408
        %v537 = vunpack.c.0.s8 %v536
        %v538 = vlaneseq
        %v539 = vshrl.u32 %v538, 7
        %v540 = vsub.s32 %v537, %v539
        %v541 = vrot.slane %v533, %v540
        %v543 = vunpack.c.l.s4 1934713408
        %v544 = vunpack.c.0.s8 %v543
        %v545 = vlaneseq
        %v546 = vshrl.u32 %v545, 7
        %v547 = vsub.s32 %v544, %v546
        %v548 = vrot.slane %v534, %v547
        %v549 = vcombine.low %v484, %v500
        %v550 = vcombine.high %v484, %v500
        %v552 = vunpack.c.l.s4 1934713408
        %v553 = vunpack.c.0.s8 %v552
        %v554 = vlaneseq
        %v555 = vshrl.u32 %v554, 7
        %v556 = vsub.s32 %v553, %v555
        %v557 = vrot.slane %v549, %v556
        %v559 = vunpack.c.l.s4 1934713408
        %v560 = vunpack.c.0.s8 %v559
        %v561 = vlaneseq
        %v562 = vshrl.u32 %v561, 7
        %v563 = vsub.s32 %v560, %v562
        %v564 = vrot.slane %v550, %v563
        %v565 = vcombine.low %v509, %v541
        %v566 = vcombine.high %v509, %v541
        %v567 = vcombine.low %v516, %v548
        %v568 = vcombine.high %v516, %v548
        %v569 = vcombine.low %v525, %v557
        %v570 = vcombine.high %v525, %v557
        %v571 = vcombine.low %v532, %v564
        %v572 = vcombine.high %v532, %v564
        %v573 = vld [vmem:[%s384] sm:$0xff]
        %v574 = vld [vmem:[%s384 + $0x8] sm:$0xff]
        %v575 = vld [vmem:[%s384 + $0x10] sm:$0xff]
        %v576 = vld [vmem:[%s384 + $0x18] sm:$0xff]
        %v577 = vld [vmem:[%s384 + $0x20] sm:$0xff]
        %v578 = vld [vmem:[%s384 + $0x28] sm:$0xff]
        %v579 = vld [vmem:[%s384 + $0x30] sm:$0xff]
        %v580 = vld [vmem:[%s384 + $0x38] sm:$0xff]
        %v581 = vcombine.low %v573, %v575
        %v582 = vcombine.high %v573, %v575
        %v584 = vunpack.c.l.s4 1983009808
        %v585 = vunpack.c.0.s8 %v584
        %v586 = vlaneseq
        %v587 = vshrl.u32 %v586, 7
        %v588 = vsub.s32 %v585, %v587
        %v589 = vrot.slane %v581, %v588
        %v591 = vunpack.c.l.s4 1983009808
        %v592 = vunpack.c.0.s8 %v591
        %v593 = vlaneseq
        %v594 = vshrl.u32 %v593, 7
        %v595 = vsub.s32 %v592, %v594
        %v596 = vrot.slane %v582, %v595
        %v597 = vcombine.low %v574, %v576
        %v598 = vcombine.high %v574, %v576
        %v600 = vunpack.c.l.s4 1983009808
        %v601 = vunpack.c.0.s8 %v600
        %v602 = vlaneseq
        %v603 = vshrl.u32 %v602, 7
        %v604 = vsub.s32 %v601, %v603
        %v605 = vrot.slane %v597, %v604
        %v607 = vunpack.c.l.s4 1983009808
        %v608 = vunpack.c.0.s8 %v607
        %v609 = vlaneseq
        %v610 = vshrl.u32 %v609, 7
        %v611 = vsub.s32 %v608, %v610
        %v612 = vrot.slane %v598, %v611
        %v613 = vcombine.low %v577, %v579
        %v614 = vcombine.high %v577, %v579
        %v616 = vunpack.c.l.s4 1983009808
        %v617 = vunpack.c.0.s8 %v616
        %v618 = vlaneseq
        %v619 = vshrl.u32 %v618, 7
        %v620 = vsub.s32 %v617, %v619
        %v621 = vrot.slane %v613, %v620
        %v623 = vunpack.c.l.s4 1983009808
        %v624 = vunpack.c.0.s8 %v623
        %v625 = vlaneseq
        %v626 = vshrl.u32 %v625, 7
        %v627 = vsub.s32 %v624, %v626
        %v628 = vrot.slane %v614, %v627
        %v629 = vcombine.low %v578, %v580
        %v630 = vcombine.high %v578, %v580
        %v632 = vunpack.c.l.s4 1983009808
        %v633 = vunpack.c.0.s8 %v632
        %v634 = vlaneseq
        %v635 = vshrl.u32 %v634, 7
        %v636 = vsub.s32 %v633, %v635
        %v637 = vrot.slane %v629, %v636
        %v639 = vunpack.c.l.s4 1983009808
        %v640 = vunpack.c.0.s8 %v639
        %v641 = vlaneseq
        %v642 = vshrl.u32 %v641, 7
        %v643 = vsub.s32 %v640, %v642
        %v644 = vrot.slane %v630, %v643
        %v645 = vcombine.low %v589, %v605
        %v646 = vcombine.high %v589, %v605
        %v648 = vunpack.c.l.s4 1934713408
        %v649 = vunpack.c.0.s8 %v648
        %v650 = vlaneseq
        %v651 = vshrl.u32 %v650, 7
        %v652 = vsub.s32 %v649, %v651
        %v653 = vrot.slane %v645, %v652
        %v655 = vunpack.c.l.s4 1934713408
        %v656 = vunpack.c.0.s8 %v655
        %v657 = vlaneseq
        %v658 = vshrl.u32 %v657, 7
        %v659 = vsub.s32 %v656, %v658
        %v660 = vrot.slane %v646, %v659
        %v661 = vcombine.low %v596, %v612
        %v662 = vcombine.high %v596, %v612
        %v664 = vunpack.c.l.s4 1934713408
        %v665 = vunpack.c.0.s8 %v664
        %v666 = vlaneseq
        %v667 = vshrl.u32 %v666, 7
        %v668 = vsub.s32 %v665, %v667
        %v669 = vrot.slane %v661, %v668
        %v671 = vunpack.c.l.s4 1934713408
        %v672 = vunpack.c.0.s8 %v671
        %v673 = vlaneseq
        %v674 = vshrl.u32 %v673, 7
        %v675 = vsub.s32 %v672, %v674
        %v676 = vrot.slane %v662, %v675
        %v677 = vcombine.low %v621, %v637
        %v678 = vcombine.high %v621, %v637
        %v680 = vunpack.c.l.s4 1934713408
        %v681 = vunpack.c.0.s8 %v680
        %v682 = vlaneseq
        %v683 = vshrl.u32 %v682, 7
        %v684 = vsub.s32 %v681, %v683
        %v685 = vrot.slane %v677, %v684
        %v687 = vunpack.c.l.s4 1934713408
        %v688 = vunpack.c.0.s8 %v687
        %v689 = vlaneseq
        %v690 = vshrl.u32 %v689, 7
        %v691 = vsub.s32 %v688, %v690
        %v692 = vrot.slane %v678, %v691
        %v693 = vcombine.low %v628, %v644
        %v694 = vcombine.high %v628, %v644
        %v696 = vunpack.c.l.s4 1934713408
        %v697 = vunpack.c.0.s8 %v696
        %v698 = vlaneseq
        %v699 = vshrl.u32 %v698, 7
        %v700 = vsub.s32 %v697, %v699
        %v701 = vrot.slane %v693, %v700
        %v703 = vunpack.c.l.s4 1934713408
        %v704 = vunpack.c.0.s8 %v703
        %v705 = vlaneseq
        %v706 = vshrl.u32 %v705, 7
        %v707 = vsub.s32 %v704, %v706
        %v708 = vrot.slane %v694, %v707
        %v709 = vcombine.low %v653, %v685
        %v710 = vcombine.high %v653, %v685
        %v711 = vcombine.low %v660, %v692
        %v712 = vcombine.high %v660, %v692
        %v713 = vcombine.low %v669, %v701
        %v714 = vcombine.high %v669, %v701
        %v715 = vcombine.low %v676, %v708
        %v716 = vcombine.high %v676, %v708
        %v717 = vld [vmem:[%s391] sm:$0xff]
        %v718 = vld [vmem:[%s391 + $0x8] sm:$0xff]
        %v719 = vld [vmem:[%s391 + $0x10] sm:$0xff]
        %v720 = vld [vmem:[%s391 + $0x18] sm:$0xff]
        %v721 = vld [vmem:[%s391 + $0x20] sm:$0xff]
        %v722 = vld [vmem:[%s391 + $0x28] sm:$0xff]
        %v723 = vld [vmem:[%s391 + $0x30] sm:$0xff]
        %v724 = vld [vmem:[%s391 + $0x38] sm:$0xff]
        %v725 = vcombine.low %v717, %v719
        %v726 = vcombine.high %v717, %v719
        %v728 = vunpack.c.l.s4 1983009808
        %v729 = vunpack.c.0.s8 %v728
        %v730 = vlaneseq
        %v731 = vshrl.u32 %v730, 7
        %v732 = vsub.s32 %v729, %v731
        %v733 = vrot.slane %v725, %v732
        %v735 = vunpack.c.l.s4 1983009808
        %v736 = vunpack.c.0.s8 %v735
        %v737 = vlaneseq
        %v738 = vshrl.u32 %v737, 7
        %v739 = vsub.s32 %v736, %v738
        %v740 = vrot.slane %v726, %v739
        %v741 = vcombine.low %v718, %v720
        %v742 = vcombine.high %v718, %v720
        %v744 = vunpack.c.l.s4 1983009808
        %v745 = vunpack.c.0.s8 %v744
        %v746 = vlaneseq
        %v747 = vshrl.u32 %v746, 7
        %v748 = vsub.s32 %v745, %v747
        %v749 = vrot.slane %v741, %v748
        %v751 = vunpack.c.l.s4 1983009808
        %v752 = vunpack.c.0.s8 %v751
        %v753 = vlaneseq
        %v754 = vshrl.u32 %v753, 7
        %v755 = vsub.s32 %v752, %v754
        %v756 = vrot.slane %v742, %v755
        %v757 = vcombine.low %v721, %v723
        %v758 = vcombine.high %v721, %v723
        %v760 = vunpack.c.l.s4 1983009808
        %v761 = vunpack.c.0.s8 %v760
        %v762 = vlaneseq
        %v763 = vshrl.u32 %v762, 7
        %v764 = vsub.s32 %v761, %v763
        %v765 = vrot.slane %v757, %v764
        %v767 = vunpack.c.l.s4 1983009808
        %v768 = vunpack.c.0.s8 %v767
        %v769 = vlaneseq
        %v770 = vshrl.u32 %v769, 7
        %v771 = vsub.s32 %v768, %v770
        %v772 = vrot.slane %v758, %v771
        %v773 = vcombine.low %v722, %v724
        %v774 = vcombine.high %v722, %v724
        %v776 = vunpack.c.l.s4 1983009808
        %v777 = vunpack.c.0.s8 %v776
        %v778 = vlaneseq
        %v779 = vshrl.u32 %v778, 7
        %v780 = vsub.s32 %v777, %v779
        %v781 = vrot.slane %v773, %v780
        %v783 = vunpack.c.l.s4 1983009808
        %v784 = vunpack.c.0.s8 %v783
        %v785 = vlaneseq
        %v786 = vshrl.u32 %v785, 7
        %v787 = vsub.s32 %v784, %v786
        %v788 = vrot.slane %v774, %v787
        %v789 = vcombine.low %v733, %v749
        %v790 = vcombine.high %v733, %v749
        %v792 = vunpack.c.l.s4 1934713408
        %v793 = vunpack.c.0.s8 %v792
        %v794 = vlaneseq
        %v795 = vshrl.u32 %v794, 7
        %v796 = vsub.s32 %v793, %v795
        %v797 = vrot.slane %v789, %v796
        %v799 = vunpack.c.l.s4 1934713408
        %v800 = vunpack.c.0.s8 %v799
        %v801 = vlaneseq
        %v802 = vshrl.u32 %v801, 7
        %v803 = vsub.s32 %v800, %v802
        %v804 = vrot.slane %v790, %v803
        %v805 = vcombine.low %v740, %v756
        %v806 = vcombine.high %v740, %v756
        %v808 = vunpack.c.l.s4 1934713408
        %v809 = vunpack.c.0.s8 %v808
        %v810 = vlaneseq
        %v811 = vshrl.u32 %v810, 7
        %v812 = vsub.s32 %v809, %v811
        %v813 = vrot.slane %v805, %v812
        %v815 = vunpack.c.l.s4 1934713408
        %v816 = vunpack.c.0.s8 %v815
        %v817 = vlaneseq
        %v818 = vshrl.u32 %v817, 7
        %v819 = vsub.s32 %v816, %v818
        %v820 = vrot.slane %v806, %v819
        %v821 = vcombine.low %v765, %v781
        %v822 = vcombine.high %v765, %v781
        %v824 = vunpack.c.l.s4 1934713408
        %v825 = vunpack.c.0.s8 %v824
        %v826 = vlaneseq
        %v827 = vshrl.u32 %v826, 7
        %v828 = vsub.s32 %v825, %v827
        %v829 = vrot.slane %v821, %v828
        %v831 = vunpack.c.l.s4 1934713408
        %v832 = vunpack.c.0.s8 %v831
        %v833 = vlaneseq
        %v834 = vshrl.u32 %v833, 7
        %v835 = vsub.s32 %v832, %v834
        %v836 = vrot.slane %v822, %v835
        %v837 = vcombine.low %v772, %v788
        %v838 = vcombine.high %v772, %v788
        %v840 = vunpack.c.l.s4 1934713408
        %v841 = vunpack.c.0.s8 %v840
        %v842 = vlaneseq
        %v843 = vshrl.u32 %v842, 7
        %v844 = vsub.s32 %v841, %v843
        %v845 = vrot.slane %v837, %v844
        %v847 = vunpack.c.l.s4 1934713408
        %v848 = vunpack.c.0.s8 %v847
        %v849 = vlaneseq
        %v850 = vshrl.u32 %v849, 7
        %v851 = vsub.s32 %v848, %v850
        %v852 = vrot.slane %v838, %v851
        %v853 = vcombine.low %v797, %v829
        %v854 = vcombine.high %v797, %v829
        %v855 = vcombine.low %v804, %v836
        %v856 = vcombine.high %v804, %v836
        %v857 = vcombine.low %v813, %v845
        %v858 = vcombine.high %v813, %v845
        %v859 = vcombine.low %v820, %v852
        %v860 = vcombine.high %v820, %v852
        %vm861 = vcmask 31744
        %v863 = vsel %vm861, %v565, 0
        %v866 = vsel %vm861, %v709, 0
        %868 = vmatprep.subr.mxu0 0.0
        %869 = vmatpush1.xpose.msra.mxu0 %v866
        %870 = vmatprep.subr.mxu0 0.0
        %871 = vmatpush1.xpose.msra.mxu0 0.0
        %872 = vmatprep.subr.mxu0 0.0
        %873 = vmatpush1.xpose.msra.mxu0 0.0
        %874 = vmatprep.subr.mxu0 0.0
        %875 = vmatpush1.xpose.msra.mxu0 0.0
        %876 = vmatprep.subr.mxu0 0.0
        %877 = vmatpush1.xpose.msra.mxu0 0.0
        %878 = vmatprep.subr.mxu0 0.0
        %879 = vmatpush1.xpose.msra.mxu0 0.0
        %880 = vmatprep.subr.mxu0 0.0
        %881 = vmatpush1.xpose.msra.mxu0 0.0
        %882 = vmatprep.subr.mxu0 0.0
        %883 = vmatpush1.xpose.msra.mxu0 0.0
        %884 = vmatprep.subr.mxu0 0.0
        %885 = vmatpush1.xpose.msra.mxu0 0.0
        %886 = vmatprep.subr.mxu0 0.0
        %887 = vmatpush1.xpose.msra.mxu0 0.0
        %888 = vmatprep.subr.mxu0 0.0
        %889 = vmatpush1.xpose.msra.mxu0 0.0
        %890 = vmatprep.subr.mxu0 0.0
        %891 = vmatpush1.xpose.msra.mxu0 0.0
        %892 = vmatprep.subr.mxu0 0.0
        %893 = vmatpush1.xpose.msra.mxu0 0.0
        %894 = vmatprep.subr.mxu0 0.0
        %895 = vmatpush1.xpose.msra.mxu0 0.0
        %896 = vmatprep.subr.mxu0 0.0
        %897 = vmatpush1.xpose.msra.mxu0 0.0
        %898 = vmatprep.subr.mxu0 0.0
        %899 = vmatpush1.xpose.msra.mxu0 0.0
        %900 = vmatprep.subr.mxu0 0.0
        %901 = vmatpush1.xpose.msra.mxu0 0.0
        %902 = vmatprep.subr.mxu0 0.0
        %903 = vmatpush1.xpose.msra.mxu0 0.0
        %904 = vmatprep.subr.mxu0 0.0
        %905 = vmatpush1.xpose.msra.mxu0 0.0
        %906 = vmatprep.subr.mxu0 0.0
        %907 = vmatpush1.xpose.msra.mxu0 0.0
        %908 = vmatprep.subr.mxu0 0.0
        %909 = vmatpush1.xpose.msra.mxu0 0.0
        %910 = vmatprep.subr.mxu0 0.0
        %911 = vmatpush1.xpose.msra.mxu0 0.0
        %912 = vmatprep.subr.mxu0 0.0
        %913 = vmatpush1.xpose.msra.mxu0 0.0
        %914 = vmatprep.subr.mxu0 0.0
        %915 = vmatpush1.xpose.msra.mxu0 0.0
        %916 = vmatprep.subr.mxu0 0.0
        %917 = vmatpush1.xpose.msra.mxu0 0.0
        %918 = vmatprep.subr.mxu0 0.0
        %919 = vmatpush1.xpose.msra.mxu0 0.0
        %920 = vmatprep.subr.mxu0 0.0
        %921 = vmatpush1.xpose.msra.mxu0 0.0
        %922 = vmatprep.subr.mxu0 0.0
        %923 = vmatpush1.xpose.msra.mxu0 0.0
        %924 = vmatprep.subr.mxu0 0.0
        %925 = vmatpush1.xpose.msra.mxu0 0.0
        %926 = vmatprep.subr.mxu0 0.0
        %927 = vmatpush1.xpose.msra.mxu0 0.0
        %928 = vmatprep.subr.mxu0 0.0
        %929 = vmatpush1.xpose.msra.mxu0 0.0
        %930 = vmatprep.subr.mxu0 0.0
        %931 = vmatpush1.xpose.msra.mxu0 0.0
        %932 = vmatprep.mubr.f32.mxu0 0.0
        %933 = vmatmul.mubr.f32.gmra.mrb[0].mxu0 %v863
        %v934 = vpop.f32.mrb[0].mxu0
        %v935 = vadd.f32 0.0, %v934
        %v936 = vpop.f32.mrb[0].mxu0
        %937 = vdwg.mxu0
        %v939 = vsel %vm861, %v566, 0
        %v942 = vsel %vm861, %v710, 0
        %944 = vmatprep.subr.mxu0 0.0
        %945 = vmatpush1.xpose.msra.mxu0 %v942
        %946 = vmatprep.subr.mxu0 0.0
        %947 = vmatpush1.xpose.msra.mxu0 0.0
        %948 = vmatprep.subr.mxu0 0.0
        %949 = vmatpush1.xpose.msra.mxu0 0.0
        %950 = vmatprep.subr.mxu0 0.0
        %951 = vmatpush1.xpose.msra.mxu0 0.0
        %952 = vmatprep.subr.mxu0 0.0
        %953 = vmatpush1.xpose.msra.mxu0 0.0
        %954 = vmatprep.subr.mxu0 0.0
        %955 = vmatpush1.xpose.msra.mxu0 0.0
        %956 = vmatprep.subr.mxu0 0.0
        %957 = vmatpush1.xpose.msra.mxu0 0.0
        %958 = vmatprep.subr.mxu0 0.0
        %959 = vmatpush1.xpose.msra.mxu0 0.0
        %960 = vmatprep.subr.mxu0 0.0
        %961 = vmatpush1.xpose.msra.mxu0 0.0
        %962 = vmatprep.subr.mxu0 0.0
        %963 = vmatpush1.xpose.msra.mxu0 0.0
        %964 = vmatprep.subr.mxu0 0.0
        %965 = vmatpush1.xpose.msra.mxu0 0.0
        %966 = vmatprep.subr.mxu0 0.0
        %967 = vmatpush1.xpose.msra.mxu0 0.0
        %968 = vmatprep.subr.mxu0 0.0
        %969 = vmatpush1.xpose.msra.mxu0 0.0
        %970 = vmatprep.subr.mxu0 0.0
        %971 = vmatpush1.xpose.msra.mxu0 0.0
        %972 = vmatprep.subr.mxu0 0.0
        %973 = vmatpush1.xpose.msra.mxu0 0.0
        %974 = vmatprep.subr.mxu0 0.0
        %975 = vmatpush1.xpose.msra.mxu0 0.0
        %976 = vmatprep.subr.mxu0 0.0
        %977 = vmatpush1.xpose.msra.mxu0 0.0
        %978 = vmatprep.subr.mxu0 0.0
        %979 = vmatpush1.xpose.msra.mxu0 0.0
        %980 = vmatprep.subr.mxu0 0.0
        %981 = vmatpush1.xpose.msra.mxu0 0.0
        %982 = vmatprep.subr.mxu0 0.0
        %983 = vmatpush1.xpose.msra.mxu0 0.0
        %984 = vmatprep.subr.mxu0 0.0
        %985 = vmatpush1.xpose.msra.mxu0 0.0
        %986 = vmatprep.subr.mxu0 0.0
        %987 = vmatpush1.xpose.msra.mxu0 0.0
        %988 = vmatprep.subr.mxu0 0.0
        %989 = vmatpush1.xpose.msra.mxu0 0.0
        %990 = vmatprep.subr.mxu0 0.0
        %991 = vmatpush1.xpose.msra.mxu0 0.0
        %992 = vmatprep.subr.mxu0 0.0
        %993 = vmatpush1.xpose.msra.mxu0 0.0
        %994 = vmatprep.subr.mxu0 0.0
        %995 = vmatpush1.xpose.msra.mxu0 0.0
        %996 = vmatprep.subr.mxu0 0.0
        %997 = vmatpush1.xpose.msra.mxu0 0.0
        %998 = vmatprep.subr.mxu0 0.0
        %999 = vmatpush1.xpose.msra.mxu0 0.0
        %1000 = vmatprep.subr.mxu0 0.0
        %1001 = vmatpush1.xpose.msra.mxu0 0.0
        %1002 = vmatprep.subr.mxu0 0.0
        %1003 = vmatpush1.xpose.msra.mxu0 0.0
        %1004 = vmatprep.subr.mxu0 0.0
        %1005 = vmatpush1.xpose.msra.mxu0 0.0
        %1006 = vmatprep.subr.mxu0 0.0
        %1007 = vmatpush1.xpose.msra.mxu0 0.0
        %1008 = vmatprep.mubr.f32.mxu0 0.0
        %1009 = vmatmul.mubr.f32.gmra.mrb[0].mxu0 %v939
        %v1010 = vpop.f32.mrb[0].mxu0
        %v1011 = vadd.f32 0.0, %v1010
        %v1012 = vpop.f32.mrb[0].mxu0
        %1013 = vdwg.mxu0
        %v1015 = vsel %vm861, %v567, 0
        %v1018 = vsel %vm861, %v711, 0
        %1020 = vmatprep.subr.mxu0 0.0
        %1021 = vmatpush1.xpose.msra.mxu0 %v1018
        %1022 = vmatprep.subr.mxu0 0.0
        %1023 = vmatpush1.xpose.msra.mxu0 0.0
        %1024 = vmatprep.subr.mxu0 0.0
        %1025 = vmatpush1.xpose.msra.mxu0 0.0
        %1026 = vmatprep.subr.mxu0 0.0
        %1027 = vmatpush1.xpose.msra.mxu0 0.0
        %1028 = vmatprep.subr.mxu0 0.0
        %1029 = vmatpush1.xpose.msra.mxu0 0.0
        %1030 = vmatprep.subr.mxu0 0.0
        %1031 = vmatpush1.xpose.msra.mxu0 0.0
        %1032 = vmatprep.subr.mxu0 0.0
        %1033 = vmatpush1.xpose.msra.mxu0 0.0
        %1034 = vmatprep.subr.mxu0 0.0
        %1035 = vmatpush1.xpose.msra.mxu0 0.0
        %1036 = vmatprep.subr.mxu0 0.0
        %1037 = vmatpush1.xpose.msra.mxu0 0.0
        %1038 = vmatprep.subr.mxu0 0.0
        %1039 = vmatpush1.xpose.msra.mxu0 0.0
        %1040 = vmatprep.subr.mxu0 0.0
        %1041 = vmatpush1.xpose.msra.mxu0 0.0
        %1042 = vmatprep.subr.mxu0 0.0
        %1043 = vmatpush1.xpose.msra.mxu0 0.0
        %1044 = vmatprep.subr.mxu0 0.0
        %1045 = vmatpush1.xpose.msra.mxu0 0.0
        %1046 = vmatprep.subr.mxu0 0.0
        %1047 = vmatpush1.xpose.msra.mxu0 0.0
        %1048 = vmatprep.subr.mxu0 0.0
        %1049 = vmatpush1.xpose.msra.mxu0 0.0
        %1050 = vmatprep.subr.mxu0 0.0
        %1051 = vmatpush1.xpose.msra.mxu0 0.0
        %1052 = vmatprep.subr.mxu0 0.0
        %1053 = vmatpush1.xpose.msra.mxu0 0.0
        %1054 = vmatprep.subr.mxu0 0.0
        %1055 = vmatpush1.xpose.msra.mxu0 0.0
        %1056 = vmatprep.subr.mxu0 0.0
        %1057 = vmatpush1.xpose.msra.mxu0 0.0
        %1058 = vmatprep.subr.mxu0 0.0
        %1059 = vmatpush1.xpose.msra.mxu0 0.0
        %1060 = vmatprep.subr.mxu0 0.0
        %1061 = vmatpush1.xpose.msra.mxu0 0.0
        %1062 = vmatprep.subr.mxu0 0.0
        %1063 = vmatpush1.xpose.msra.mxu0 0.0
        %1064 = vmatprep.subr.mxu0 0.0
        %1065 = vmatpush1.xpose.msra.mxu0 0.0
        %1066 = vmatprep.subr.mxu0 0.0
        %1067 = vmatpush1.xpose.msra.mxu0 0.0
        %1068 = vmatprep.subr.mxu0 0.0
        %1069 = vmatpush1.xpose.msra.mxu0 0.0
        %1070 = vmatprep.subr.mxu0 0.0
        %1071 = vmatpush1.xpose.msra.mxu0 0.0
        %1072 = vmatprep.subr.mxu0 0.0
        %1073 = vmatpush1.xpose.msra.mxu0 0.0
        %1074 = vmatprep.subr.mxu0 0.0
        %1075 = vmatpush1.xpose.msra.mxu0 0.0
        %1076 = vmatprep.subr.mxu0 0.0
        %1077 = vmatpush1.xpose.msra.mxu0 0.0
        %1078 = vmatprep.subr.mxu0 0.0
        %1079 = vmatpush1.xpose.msra.mxu0 0.0
        %1080 = vmatprep.subr.mxu0 0.0
        %1081 = vmatpush1.xpose.msra.mxu0 0.0
        %1082 = vmatprep.subr.mxu0 0.0
        %1083 = vmatpush1.xpose.msra.mxu0 0.0
        %1084 = vmatprep.mubr.f32.mxu0 0.0
        %1085 = vmatmul.mubr.f32.gmra.mrb[0].mxu0 %v1015
        %v1086 = vpop.f32.mrb[0].mxu0
        %v1087 = vadd.f32 0.0, %v1086
        %v1088 = vpop.f32.mrb[0].mxu0
        %1089 = vdwg.mxu0
        %v1091 = vsel %vm861, %v568, 0
        %v1094 = vsel %vm861, %v712, 0
        %1096 = vmatprep.subr.mxu0 0.0
        %1097 = vmatpush1.xpose.msra.mxu0 %v1094
        %1098 = vmatprep.subr.mxu0 0.0
        %1099 = vmatpush1.xpose.msra.mxu0 0.0
        %1100 = vmatprep.subr.mxu0 0.0
        %1101 = vmatpush1.xpose.msra.mxu0 0.0
        %1102 = vmatprep.subr.mxu0 0.0
        %1103 = vmatpush1.xpose.msra.mxu0 0.0
        %1104 = vmatprep.subr.mxu0 0.0
        %1105 = vmatpush1.xpose.msra.mxu0 0.0
        %1106 = vmatprep.subr.mxu0 0.0
        %1107 = vmatpush1.xpose.msra.mxu0 0.0
        %1108 = vmatprep.subr.mxu0 0.0
        %1109 = vmatpush1.xpose.msra.mxu0 0.0
        %1110 = vmatprep.subr.mxu0 0.0
        %1111 = vmatpush1.xpose.msra.mxu0 0.0
        %1112 = vmatprep.subr.mxu0 0.0
        %1113 = vmatpush1.xpose.msra.mxu0 0.0
        %1114 = vmatprep.subr.mxu0 0.0
        %1115 = vmatpush1.xpose.msra.mxu0 0.0
        %1116 = vmatprep.subr.mxu0 0.0
        %1117 = vmatpush1.xpose.msra.mxu0 0.0
        %1118 = vmatprep.subr.mxu0 0.0
        %1119 = vmatpush1.xpose.msra.mxu0 0.0
        %1120 = vmatprep.subr.mxu0 0.0
        %1121 = vmatpush1.xpose.msra.mxu0 0.0
        %1122 = vmatprep.subr.mxu0 0.0
        %1123 = vmatpush1.xpose.msra.mxu0 0.0
        %1124 = vmatprep.subr.mxu0 0.0
        %1125 = vmatpush1.xpose.msra.mxu0 0.0
        %1126 = vmatprep.subr.mxu0 0.0
        %1127 = vmatpush1.xpose.msra.mxu0 0.0
        %1128 = vmatprep.subr.mxu0 0.0
        %1129 = vmatpush1.xpose.msra.mxu0 0.0
        %1130 = vmatprep.subr.mxu0 0.0
        %1131 = vmatpush1.xpose.msra.mxu0 0.0
        %1132 = vmatprep.subr.mxu0 0.0
        %1133 = vmatpush1.xpose.msra.mxu0 0.0
        %1134 = vmatprep.subr.mxu0 0.0
        %1135 = vmatpush1.xpose.msra.mxu0 0.0
        %1136 = vmatprep.subr.mxu0 0.0
        %1137 = vmatpush1.xpose.msra.mxu0 0.0
        %1138 = vmatprep.subr.mxu0 0.0
        %1139 = vmatpush1.xpose.msra.mxu0 0.0
        %1140 = vmatprep.subr.mxu0 0.0
        %1141 = vmatpush1.xpose.msra.mxu0 0.0
        %1142 = vmatprep.subr.mxu0 0.0
        %1143 = vmatpush1.xpose.msra.mxu0 0.0
        %1144 = vmatprep.subr.mxu0 0.0
        %1145 = vmatpush1.xpose.msra.mxu0 0.0
        %1146 = vmatprep.subr.mxu0 0.0
        %1147 = vmatpush1.xpose.msra.mxu0 0.0
        %1148 = vmatprep.subr.mxu0 0.0
        %1149 = vmatpush1.xpose.msra.mxu0 0.0
        %1150 = vmatprep.subr.mxu0 0.0
        %1151 = vmatpush1.xpose.msra.mxu0 0.0
        %1152 = vmatprep.subr.mxu0 0.0
        %1153 = vmatpush1.xpose.msra.mxu0 0.0
        %1154 = vmatprep.subr.mxu0 0.0
        %1155 = vmatpush1.xpose.msra.mxu0 0.0
        %1156 = vmatprep.subr.mxu0 0.0
        %1157 = vmatpush1.xpose.msra.mxu0 0.0
        %1158 = vmatprep.subr.mxu0 0.0
        %1159 = vmatpush1.xpose.msra.mxu0 0.0
        %1160 = vmatprep.mubr.f32.mxu0 0.0
        %1161 = vmatmul.mubr.f32.gmra.mrb[0].mxu0 %v1091
        %v1162 = vpop.f32.mrb[0].mxu0
        %v1163 = vadd.f32 0.0, %v1162
        %v1164 = vpop.f32.mrb[0].mxu0
        %1165 = vdwg.mxu0
        %v1167 = vsel %vm861, %v569, 0
        %v1170 = vsel %vm861, %v713, 0
        %1172 = vmatprep.subr.mxu0 0.0
        %1173 = vmatpush1.xpose.msra.mxu0 %v1170
        %1174 = vmatprep.subr.mxu0 0.0
        %1175 = vmatpush1.xpose.msra.mxu0 0.0
        %1176 = vmatprep.subr.mxu0 0.0
        %1177 = vmatpush1.xpose.msra.mxu0 0.0
        %1178 = vmatprep.subr.mxu0 0.0
        %1179 = vmatpush1.xpose.msra.mxu0 0.0
        %1180 = vmatprep.subr.mxu0 0.0
        %1181 = vmatpush1.xpose.msra.mxu0 0.0
        %1182 = vmatprep.subr.mxu0 0.0
        %1183 = vmatpush1.xpose.msra.mxu0 0.0
        %1184 = vmatprep.subr.mxu0 0.0
        %1185 = vmatpush1.xpose.msra.mxu0 0.0
        %1186 = vmatprep.subr.mxu0 0.0
        %1187 = vmatpush1.xpose.msra.mxu0 0.0
        %1188 = vmatprep.subr.mxu0 0.0
        %1189 = vmatpush1.xpose.msra.mxu0 0.0
        %1190 = vmatprep.subr.mxu0 0.0
        %1191 = vmatpush1.xpose.msra.mxu0 0.0
        %1192 = vmatprep.subr.mxu0 0.0
        %1193 = vmatpush1.xpose.msra.mxu0 0.0
        %1194 = vmatprep.subr.mxu0 0.0
        %1195 = vmatpush1.xpose.msra.mxu0 0.0
        %1196 = vmatprep.subr.mxu0 0.0
        %1197 = vmatpush1.xpose.msra.mxu0 0.0
        %1198 = vmatprep.subr.mxu0 0.0
        %1199 = vmatpush1.xpose.msra.mxu0 0.0
        %1200 = vmatprep.subr.mxu0 0.0
        %1201 = vmatpush1.xpose.msra.mxu0 0.0
        %1202 = vmatprep.subr.mxu0 0.0
        %1203 = vmatpush1.xpose.msra.mxu0 0.0
        %1204 = vmatprep.subr.mxu0 0.0
        %1205 = vmatpush1.xpose.msra.mxu0 0.0
        %1206 = vmatprep.subr.mxu0 0.0
        %1207 = vmatpush1.xpose.msra.mxu0 0.0
        %1208 = vmatprep.subr.mxu0 0.0
        %1209 = vmatpush1.xpose.msra.mxu0 0.0
        %1210 = vmatprep.subr.mxu0 0.0
        %1211 = vmatpush1.xpose.msra.mxu0 0.0
        %1212 = vmatprep.subr.mxu0 0.0
        %1213 = vmatpush1.xpose.msra.mxu0 0.0
        %1214 = vmatprep.subr.mxu0 0.0
        %1215 = vmatpush1.xpose.msra.mxu0 0.0
        %1216 = vmatprep.subr.mxu0 0.0
        %1217 = vmatpush1.xpose.msra.mxu0 0.0
        %1218 = vmatprep.subr.mxu0 0.0
        %1219 = vmatpush1.xpose.msra.mxu0 0.0
        %1220 = vmatprep.subr.mxu0 0.0
        %1221 = vmatpush1.xpose.msra.mxu0 0.0
        %1222 = vmatprep.subr.mxu0 0.0
        %1223 = vmatpush1.xpose.msra.mxu0 0.0
        %1224 = vmatprep.subr.mxu0 0.0
        %1225 = vmatpush1.xpose.msra.mxu0 0.0
        %1226 = vmatprep.subr.mxu0 0.0
        %1227 = vmatpush1.xpose.msra.mxu0 0.0
        %1228 = vmatprep.subr.mxu0 0.0
        %1229 = vmatpush1.xpose.msra.mxu0 0.0
        %1230 = vmatprep.subr.mxu0 0.0
        %1231 = vmatpush1.xpose.msra.mxu0 0.0
        %1232 = vmatprep.subr.mxu0 0.0
        %1233 = vmatpush1.xpose.msra.mxu0 0.0
        %1234 = vmatprep.subr.mxu0 0.0
        %1235 = vmatpush1.xpose.msra.mxu0 0.0
        %1236 = vmatprep.mubr.f32.mxu0 0.0
        %1237 = vmatmul.mubr.f32.gmra.mrb[0].mxu0 %v1167
        %v1238 = vpop.f32.mrb[0].mxu0
        %v1239 = vadd.f32 0.0, %v1238
        %v1240 = vpop.f32.mrb[0].mxu0
        %1241 = vdwg.mxu0
        %v1243 = vsel %vm861, %v570, 0
        %v1246 = vsel %vm861, %v714, 0
        %1248 = vmatprep.subr.mxu0 0.0
        %1249 = vmatpush1.xpose.msra.mxu0 %v1246
        %1250 = vmatprep.subr.mxu0 0.0
        %1251 = vmatpush1.xpose.msra.mxu0 0.0
        %1252 = vmatprep.subr.mxu0 0.0
        %1253 = vmatpush1.xpose.msra.mxu0 0.0
        %1254 = vmatprep.subr.mxu0 0.0
        %1255 = vmatpush1.xpose.msra.mxu0 0.0
        %1256 = vmatprep.subr.mxu0 0.0
        %1257 = vmatpush1.xpose.msra.mxu0 0.0
        %1258 = vmatprep.subr.mxu0 0.0
        %1259 = vmatpush1.xpose.msra.mxu0 0.0
        %1260 = vmatprep.subr.mxu0 0.0
        %1261 = vmatpush1.xpose.msra.mxu0 0.0
        %1262 = vmatprep.subr.mxu0 0.0
        %1263 = vmatpush1.xpose.msra.mxu0 0.0
        %1264 = vmatprep.subr.mxu0 0.0
        %1265 = vmatpush1.xpose.msra.mxu0 0.0
        %1266 = vmatprep.subr.mxu0 0.0
        %1267 = vmatpush1.xpose.msra.mxu0 0.0
        %1268 = vmatprep.subr.mxu0 0.0
        %1269 = vmatpush1.xpose.msra.mxu0 0.0
        %1270 = vmatprep.subr.mxu0 0.0
        %1271 = vmatpush1.xpose.msra.mxu0 0.0
        %1272 = vmatprep.subr.mxu0 0.0
        %1273 = vmatpush1.xpose.msra.mxu0 0.0
        %1274 = vmatprep.subr.mxu0 0.0
        %1275 = vmatpush1.xpose.msra.mxu0 0.0
        %1276 = vmatprep.subr.mxu0 0.0
        %1277 = vmatpush1.xpose.msra.mxu0 0.0
        %1278 = vmatprep.subr.mxu0 0.0
        %1279 = vmatpush1.xpose.msra.mxu0 0.0
        %1280 = vmatprep.subr.mxu0 0.0
        %1281 = vmatpush1.xpose.msra.mxu0 0.0
        %1282 = vmatprep.subr.mxu0 0.0
        %1283 = vmatpush1.xpose.msra.mxu0 0.0
        %1284 = vmatprep.subr.mxu0 0.0
        %1285 = vmatpush1.xpose.msra.mxu0 0.0
        %1286 = vmatprep.subr.mxu0 0.0
        %1287 = vmatpush1.xpose.msra.mxu0 0.0
        %1288 = vmatprep.subr.mxu0 0.0
        %1289 = vmatpush1.xpose.msra.mxu0 0.0
        %1290 = vmatprep.subr.mxu0 0.0
        %1291 = vmatpush1.xpose.msra.mxu0 0.0
        %1292 = vmatprep.subr.mxu0 0.0
        %1293 = vmatpush1.xpose.msra.mxu0 0.0
        %1294 = vmatprep.subr.mxu0 0.0
        %1295 = vmatpush1.xpose.msra.mxu0 0.0
        %1296 = vmatprep.subr.mxu0 0.0
        %1297 = vmatpush1.xpose.msra.mxu0 0.0
        %1298 = vmatprep.subr.mxu0 0.0
        %1299 = vmatpush1.xpose.msra.mxu0 0.0
        %1300 = vmatprep.subr.mxu0 0.0
        %1301 = vmatpush1.xpose.msra.mxu0 0.0
        %1302 = vmatprep.subr.mxu0 0.0
        %1303 = vmatpush1.xpose.msra.mxu0 0.0
        %1304 = vmatprep.subr.mxu0 0.0
        %1305 = vmatpush1.xpose.msra.mxu0 0.0
        %1306 = vmatprep.subr.mxu0 0.0
        %1307 = vmatpush1.xpose.msra.mxu0 0.0
        %1308 = vmatprep.subr.mxu0 0.0
        %1309 = vmatpush1.xpose.msra.mxu0 0.0
        %1310 = vmatprep.subr.mxu0 0.0
        %1311 = vmatpush1.xpose.msra.mxu0 0.0
        %1312 = vmatprep.mubr.f32.mxu0 0.0
        %1313 = vmatmul.mubr.f32.gmra.mrb[0].mxu0 %v1243
        %v1314 = vpop.f32.mrb[0].mxu0
        %v1315 = vadd.f32 0.0, %v1314
        %v1316 = vpop.f32.mrb[0].mxu0
        %1317 = vdwg.mxu0
        %v1319 = vsel %vm861, %v571, 0
        %v1322 = vsel %vm861, %v715, 0
        %1324 = vmatprep.subr.mxu0 0.0
        %1325 = vmatpush1.xpose.msra.mxu0 %v1322
        %1326 = vmatprep.subr.mxu0 0.0
        %1327 = vmatpush1.xpose.msra.mxu0 0.0
        %1328 = vmatprep.subr.mxu0 0.0
        %1329 = vmatpush1.xpose.msra.mxu0 0.0
        %1330 = vmatprep.subr.mxu0 0.0
        %1331 = vmatpush1.xpose.msra.mxu0 0.0
        %1332 = vmatprep.subr.mxu0 0.0
        %1333 = vmatpush1.xpose.msra.mxu0 0.0
        %1334 = vmatprep.subr.mxu0 0.0
        %1335 = vmatpush1.xpose.msra.mxu0 0.0
        %1336 = vmatprep.subr.mxu0 0.0
        %1337 = vmatpush1.xpose.msra.mxu0 0.0
        %1338 = vmatprep.subr.mxu0 0.0
        %1339 = vmatpush1.xpose.msra.mxu0 0.0
        %1340 = vmatprep.subr.mxu0 0.0
        %1341 = vmatpush1.xpose.msra.mxu0 0.0
        %1342 = vmatprep.subr.mxu0 0.0
        %1343 = vmatpush1.xpose.msra.mxu0 0.0
        %1344 = vmatprep.subr.mxu0 0.0
        %1345 = vmatpush1.xpose.msra.mxu0 0.0
        %1346 = vmatprep.subr.mxu0 0.0
        %1347 = vmatpush1.xpose.msra.mxu0 0.0
        %1348 = vmatprep.subr.mxu0 0.0
        %1349 = vmatpush1.xpose.msra.mxu0 0.0
        %1350 = vmatprep.subr.mxu0 0.0
        %1351 = vmatpush1.xpose.msra.mxu0 0.0
        %1352 = vmatprep.subr.mxu0 0.0
        %1353 = vmatpush1.xpose.msra.mxu0 0.0
        %1354 = vmatprep.subr.mxu0 0.0
        %1355 = vmatpush1.xpose.msra.mxu0 0.0
        %1356 = vmatprep.subr.mxu0 0.0
        %1357 = vmatpush1.xpose.msra.mxu0 0.0
        %1358 = vmatprep.subr.mxu0 0.0
        %1359 = vmatpush1.xpose.msra.mxu0 0.0
        %1360 = vmatprep.subr.mxu0 0.0
        %1361 = vmatpush1.xpose.msra.mxu0 0.0
        %1362 = vmatprep.subr.mxu0 0.0
        %1363 = vmatpush1.xpose.msra.mxu0 0.0
        %1364 = vmatprep.subr.mxu0 0.0
        %1365 = vmatpush1.xpose.msra.mxu0 0.0
        %1366 = vmatprep.subr.mxu0 0.0
        %1367 = vmatpush1.xpose.msra.mxu0 0.0
        %1368 = vmatprep.subr.mxu0 0.0
        %1369 = vmatpush1.xpose.msra.mxu0 0.0
        %1370 = vmatprep.subr.mxu0 0.0
        %1371 = vmatpush1.xpose.msra.mxu0 0.0
        %1372 = vmatprep.subr.mxu0 0.0
        %1373 = vmatpush1.xpose.msra.mxu0 0.0
        %1374 = vmatprep.subr.mxu0 0.0
        %1375 = vmatpush1.xpose.msra.mxu0 0.0
        %1376 = vmatprep.subr.mxu0 0.0
        %1377 = vmatpush1.xpose.msra.mxu0 0.0
        %1378 = vmatprep.subr.mxu0 0.0
        %1379 = vmatpush1.xpose.msra.mxu0 0.0
        %1380 = vmatprep.subr.mxu0 0.0
        %1381 = vmatpush1.xpose.msra.mxu0 0.0
        %1382 = vmatprep.subr.mxu0 0.0
        %1383 = vmatpush1.xpose.msra.mxu0 0.0
        %1384 = vmatprep.subr.mxu0 0.0
        %1385 = vmatpush1.xpose.msra.mxu0 0.0
        %1386 = vmatprep.subr.mxu0 0.0
        %1387 = vmatpush1.xpose.msra.mxu0 0.0
        %1388 = vmatprep.mubr.f32.mxu0 0.0
        %1389 = vmatmul.mubr.f32.gmra.mrb[0].mxu0 %v1319
        %v1390 = vpop.f32.mrb[0].mxu0
        %v1391 = vadd.f32 0.0, %v1390
        %v1392 = vpop.f32.mrb[0].mxu0
        %1393 = vdwg.mxu0
        %v1395 = vsel %vm861, %v572, 0
        %v1398 = vsel %vm861, %v716, 0
        %1400 = vmatprep.subr.mxu0 0.0
        %1401 = vmatpush1.xpose.msra.mxu0 %v1398
        %1402 = vmatprep.subr.mxu0 0.0
        %1403 = vmatpush1.xpose.msra.mxu0 0.0
        %1404 = vmatprep.subr.mxu0 0.0
        %1405 = vmatpush1.xpose.msra.mxu0 0.0
        %1406 = vmatprep.subr.mxu0 0.0
        %1407 = vmatpush1.xpose.msra.mxu0 0.0
        %1408 = vmatprep.subr.mxu0 0.0
        %1409 = vmatpush1.xpose.msra.mxu0 0.0
        %1410 = vmatprep.subr.mxu0 0.0
        %1411 = vmatpush1.xpose.msra.mxu0 0.0
        %1412 = vmatprep.subr.mxu0 0.0
        %1413 = vmatpush1.xpose.msra.mxu0 0.0
        %1414 = vmatprep.subr.mxu0 0.0
        %1415 = vmatpush1.xpose.msra.mxu0 0.0
        %1416 = vmatprep.subr.mxu0 0.0
        %1417 = vmatpush1.xpose.msra.mxu0 0.0
        %1418 = vmatprep.subr.mxu0 0.0
        %1419 = vmatpush1.xpose.msra.mxu0 0.0
        %1420 = vmatprep.subr.mxu0 0.0
        %1421 = vmatpush1.xpose.msra.mxu0 0.0
        %1422 = vmatprep.subr.mxu0 0.0
        %1423 = vmatpush1.xpose.msra.mxu0 0.0
        %1424 = vmatprep.subr.mxu0 0.0
        %1425 = vmatpush1.xpose.msra.mxu0 0.0
        %1426 = vmatprep.subr.mxu0 0.0
        %1427 = vmatpush1.xpose.msra.mxu0 0.0
        %1428 = vmatprep.subr.mxu0 0.0
        %1429 = vmatpush1.xpose.msra.mxu0 0.0
        %1430 = vmatprep.subr.mxu0 0.0
        %1431 = vmatpush1.xpose.msra.mxu0 0.0
        %1432 = vmatprep.subr.mxu0 0.0
        %1433 = vmatpush1.xpose.msra.mxu0 0.0
        %1434 = vmatprep.subr.mxu0 0.0
        %1435 = vmatpush1.xpose.msra.mxu0 0.0
        %1436 = vmatprep.subr.mxu0 0.0
        %1437 = vmatpush1.xpose.msra.mxu0 0.0
        %1438 = vmatprep.subr.mxu0 0.0
        %1439 = vmatpush1.xpose.msra.mxu0 0.0
        %1440 = vmatprep.subr.mxu0 0.0
        %1441 = vmatpush1.xpose.msra.mxu0 0.0
        %1442 = vmatprep.subr.mxu0 0.0
        %1443 = vmatpush1.xpose.msra.mxu0 0.0
        %1444 = vmatprep.subr.mxu0 0.0
        %1445 = vmatpush1.xpose.msra.mxu0 0.0
        %1446 = vmatprep.subr.mxu0 0.0
        %1447 = vmatpush1.xpose.msra.mxu0 0.0
        %1448 = vmatprep.subr.mxu0 0.0
        %1449 = vmatpush1.xpose.msra.mxu0 0.0
        %1450 = vmatprep.subr.mxu0 0.0
        %1451 = vmatpush1.xpose.msra.mxu0 0.0
        %1452 = vmatprep.subr.mxu0 0.0
        %1453 = vmatpush1.xpose.msra.mxu0 0.0
        %1454 = vmatprep.subr.mxu0 0.0
        %1455 = vmatpush1.xpose.msra.mxu0 0.0
        %1456 = vmatprep.subr.mxu0 0.0
        %1457 = vmatpush1.xpose.msra.mxu0 0.0
        %1458 = vmatprep.subr.mxu0 0.0
        %1459 = vmatpush1.xpose.msra.mxu0 0.0
        %1460 = vmatprep.subr.mxu0 0.0
        %1461 = vmatpush1.xpose.msra.mxu0 0.0
        %1462 = vmatprep.subr.mxu0 0.0
        %1463 = vmatpush1.xpose.msra.mxu0 0.0
        %1464 = vmatprep.mubr.f32.mxu0 0.0
        %1465 = vmatmul.mubr.f32.gmra.mrb[0].mxu0 %v1395
        %v1466 = vpop.f32.mrb[0].mxu0
        %v1467 = vadd.f32 0.0, %v1466
        %v1468 = vpop.f32.mrb[0].mxu0
        %1469 = vdwg.mxu0
        %v1470 = vmul.f32 %v935, 0.5
        %v1471 = vmul.f32 %v1011, 0.5
        %v1472 = vmul.f32 %v1087, 0.5
        %v1473 = vmul.f32 %v1163, 0.5
        %v1474 = vmul.f32 %v1239, 0.5
        %v1475 = vmul.f32 %v1315, 0.5
        %v1476 = vmul.f32 %v1391, 0.5
        %v1477 = vmul.f32 %v1467, 0.5
        %vm1478 = vcmask 64512
        %v1479 = vsel %vm1478, %v1470, -inf
        %1480 = vmax.xlane.f32.xlu0 %v1479
        %v1481 = vpop.xlane.xlu0 %1480
        %v1482 = vsel %vm1478, %v1471, -inf
        %1483 = vmax.xlane.f32.xlu0 %v1482
        %v1484 = vpop.xlane.xlu0 %1483
        %v1485 = vsel %vm1478, %v1472, -inf
        %1486 = vmax.xlane.f32.xlu0 %v1485
        %v1487 = vpop.xlane.xlu0 %1486
        %v1488 = vsel %vm1478, %v1473, -inf
        %1489 = vmax.xlane.f32.xlu0 %v1488
        %v1490 = vpop.xlane.xlu0 %1489
        %v1491 = vsel %vm1478, %v1474, -inf
        %1492 = vmax.xlane.f32.xlu0 %v1491
        %v1493 = vpop.xlane.xlu0 %1492
        %v1494 = vsel %vm1478, %v1475, -inf
        %1495 = vmax.xlane.f32.xlu0 %v1494
        %v1496 = vpop.xlane.xlu0 %1495
        %v1497 = vsel %vm1478, %v1476, -inf
        %1498 = vmax.xlane.f32.xlu0 %v1497
        %v1499 = vpop.xlane.xlu0 %1498
        %v1500 = vsel %vm1478, %v1477, -inf
        %1501 = vmax.xlane.f32.xlu0 %v1500
        %v1502 = vpop.xlane.xlu0 %1501
        %v1503 = vsub.f32 %v1470, %v1481
        %v1504 = vsub.f32 %v1471, %v1484
        %v1505 = vsub.f32 %v1472, %v1487
        %v1506 = vsub.f32 %v1473, %v1490
        %v1507 = vsub.f32 %v1474, %v1493
        %v1508 = vsub.f32 %v1475, %v1496
        %v1509 = vsub.f32 %v1476, %v1499
        %v1510 = vsub.f32 %v1477, %v1502
        %v1511 = vmul.f32 %v1503, 1.442695
        %v1512 = vpow.pop %v1511
        %v1513 = vmul.f32 %v1504, 1.442695
        %v1514 = vpow.pop %v1513
        %v1515 = vmul.f32 %v1505, 1.442695
        %v1516 = vpow.pop %v1515
        %v1517 = vmul.f32 %v1506, 1.442695
        %v1518 = vpow.pop %v1517
        %v1519 = vmul.f32 %v1507, 1.442695
        %v1520 = vpow.pop %v1519
        %v1521 = vmul.f32 %v1508, 1.442695
        %v1522 = vpow.pop %v1521
        %v1523 = vmul.f32 %v1509, 1.442695
        %v1524 = vpow.pop %v1523
        %v1525 = vmul.f32 %v1510, 1.442695
        %v1526 = vpow.pop %v1525
        %v1527 = vsel %vm1478, %v1512, 0.0
        %1528 = vadd.xlane.f32.xlu0 %v1527
        %v1529 = vpop.xlane.xlu0 %1528
        %v1530 = vsel %vm1478, %v1514, 0.0
        %1531 = vadd.xlane.f32.xlu0 %v1530
        %v1532 = vpop.xlane.xlu0 %1531
        %v1533 = vsel %vm1478, %v1516, 0.0
        %1534 = vadd.xlane.f32.xlu0 %v1533
        %v1535 = vpop.xlane.xlu0 %1534
        %v1536 = vsel %vm1478, %v1518, 0.0
        %1537 = vadd.xlane.f32.xlu0 %v1536
        %v1538 = vpop.xlane.xlu0 %1537
        %v1539 = vsel %vm1478, %v1520, 0.0
        %1540 = vadd.xlane.f32.xlu0 %v1539
        %v1541 = vpop.xlane.xlu0 %1540
        %v1542 = vsel %vm1478, %v1522, 0.0
        %1543 = vadd.xlane.f32.xlu0 %v1542
        %v1544 = vpop.xlane.xlu0 %1543
        %v1545 = vsel %vm1478, %v1524, 0.0
        %1546 = vadd.xlane.f32.xlu0 %v1545
        %v1547 = vpop.xlane.xlu0 %1546
        %v1548 = vsel %vm1478, %v1526, 0.0
        %1549 = vadd.xlane.f32.xlu0 %v1548
        %v1550 = vpop.xlane.xlu0 %1549
        %v1551 = vrcp.pop %v1529
        %v1552 = vrcp.pop %v1532
        %v1553 = vrcp.pop %v1535
        %v1554 = vrcp.pop %v1538
        %v1555 = vrcp.pop %v1541
        %v1556 = vrcp.pop %v1544
        %v1557 = vrcp.pop %v1547
        %v1558 = vrcp.pop %v1550
        %v1559 = vmul.f32 %v1512, %v1551
        %v1560 = vmul.f32 %v1514, %v1552
        %v1561 = vmul.f32 %v1516, %v1553
        %v1562 = vmul.f32 %v1518, %v1554
        %v1563 = vmul.f32 %v1520, %v1555
        %v1564 = vmul.f32 %v1522, %v1556
        %v1565 = vmul.f32 %v1524, %v1557
        %v1566 = vmul.f32 %v1526, %v1558
        %v1568 = vsel %vm1478, %v1559, 0
        %1570 = vmatprep.subr.mxu0 0.0
        %1571 = vmatpush1.msra.mxu0 %v853
        %1572 = vmatprep.subr.mxu0 0.0
        %1573 = vmatpush1.msra.mxu0 0.0
        %1574 = vmatprep.subr.mxu0 0.0
        %1575 = vmatpush1.msra.mxu0 0.0
        %1576 = vmatprep.subr.mxu0 0.0
        %1577 = vmatpush1.msra.mxu0 0.0
        %1578 = vmatprep.subr.mxu0 0.0
        %1579 = vmatpush1.msra.mxu0 0.0
        %1580 = vmatprep.subr.mxu0 0.0
        %1581 = vmatpush1.msra.mxu0 0.0
        %1582 = vmatprep.subr.mxu0 0.0
        %1583 = vmatpush1.msra.mxu0 0.0
        %1584 = vmatprep.subr.mxu0 0.0
        %1585 = vmatpush1.msra.mxu0 0.0
        %1586 = vmatprep.subr.mxu0 0.0
        %1587 = vmatpush1.msra.mxu0 0.0
        %1588 = vmatprep.subr.mxu0 0.0
        %1589 = vmatpush1.msra.mxu0 0.0
        %1590 = vmatprep.subr.mxu0 0.0
        %1591 = vmatpush1.msra.mxu0 0.0
        %1592 = vmatprep.subr.mxu0 0.0
        %1593 = vmatpush1.msra.mxu0 0.0
        %1594 = vmatprep.subr.mxu0 0.0
        %1595 = vmatpush1.msra.mxu0 0.0
        %1596 = vmatprep.subr.mxu0 0.0
        %1597 = vmatpush1.msra.mxu0 0.0
        %1598 = vmatprep.subr.mxu0 0.0
        %1599 = vmatpush1.msra.mxu0 0.0
        %1600 = vmatprep.subr.mxu0 0.0
        %1601 = vmatpush1.msra.mxu0 0.0
        %1602 = vmatprep.subr.mxu0 0.0
        %1603 = vmatpush1.msra.mxu0 0.0
        %1604 = vmatprep.subr.mxu0 0.0
        %1605 = vmatpush1.msra.mxu0 0.0
        %1606 = vmatprep.subr.mxu0 0.0
        %1607 = vmatpush1.msra.mxu0 0.0
        %1608 = vmatprep.subr.mxu0 0.0
        %1609 = vmatpush1.msra.mxu0 0.0
        %1610 = vmatprep.subr.mxu0 0.0
        %1611 = vmatpush1.msra.mxu0 0.0
        %1612 = vmatprep.subr.mxu0 0.0
        %1613 = vmatpush1.msra.mxu0 0.0
        %1614 = vmatprep.subr.mxu0 0.0
        %1615 = vmatpush1.msra.mxu0 0.0
        %1616 = vmatprep.subr.mxu0 0.0
        %1617 = vmatpush1.msra.mxu0 0.0
        %1618 = vmatprep.subr.mxu0 0.0
        %1619 = vmatpush1.msra.mxu0 0.0
        %1620 = vmatprep.subr.mxu0 0.0
        %1621 = vmatpush1.msra.mxu0 0.0
        %1622 = vmatprep.subr.mxu0 0.0
        %1623 = vmatpush1.msra.mxu0 0.0
        %1624 = vmatprep.subr.mxu0 0.0
        %1625 = vmatpush1.msra.mxu0 0.0
        %1626 = vmatprep.subr.mxu0 0.0
        %1627 = vmatpush1.msra.mxu0 0.0
        %1628 = vmatprep.subr.mxu0 0.0
        %1629 = vmatpush1.msra.mxu0 0.0
        %1630 = vmatprep.subr.mxu0 0.0
        %1631 = vmatpush1.msra.mxu0 0.0
        %1632 = vmatprep.subr.mxu0 0.0
        %1633 = vmatpush1.msra.mxu0 0.0
        %1634 = vmatprep.mubr.f32.mxu0 0.0
        %1635 = vmatmul.mubr.f32.gmra.mrb[0].mxu0 %v1568
        %v1636 = vpop.f32.mrb[0].mxu0
        %v1637 = vadd.f32 0.0, %v1636
        %v1638 = vpop.f32.mrb[0].mxu0
        %1639 = vdwg.mxu0
        %v1641 = vsel %vm1478, %v1560, 0
        %1643 = vmatprep.subr.mxu0 0.0
        %1644 = vmatpush1.msra.mxu0 %v854
        %1645 = vmatprep.subr.mxu0 0.0
        %1646 = vmatpush1.msra.mxu0 0.0
        %1647 = vmatprep.subr.mxu0 0.0
        %1648 = vmatpush1.msra.mxu0 0.0
        %1649 = vmatprep.subr.mxu0 0.0
        %1650 = vmatpush1.msra.mxu0 0.0
        %1651 = vmatprep.subr.mxu0 0.0
        %1652 = vmatpush1.msra.mxu0 0.0
        %1653 = vmatprep.subr.mxu0 0.0
        %1654 = vmatpush1.msra.mxu0 0.0
        %1655 = vmatprep.subr.mxu0 0.0
        %1656 = vmatpush1.msra.mxu0 0.0
        %1657 = vmatprep.subr.mxu0 0.0
        %1658 = vmatpush1.msra.mxu0 0.0
        %1659 = vmatprep.subr.mxu0 0.0
        %1660 = vmatpush1.msra.mxu0 0.0
        %1661 = vmatprep.subr.mxu0 0.0
        %1662 = vmatpush1.msra.mxu0 0.0
        %1663 = vmatprep.subr.mxu0 0.0
        %1664 = vmatpush1.msra.mxu0 0.0
        %1665 = vmatprep.subr.mxu0 0.0
        %1666 = vmatpush1.msra.mxu0 0.0
        %1667 = vmatprep.subr.mxu0 0.0
        %1668 = vmatpush1.msra.mxu0 0.0
        %1669 = vmatprep.subr.mxu0 0.0
        %1670 = vmatpush1.msra.mxu0 0.0
        %1671 = vmatprep.subr.mxu0 0.0
        %1672 = vmatpush1.msra.mxu0 0.0
        %1673 = vmatprep.subr.mxu0 0.0
        %1674 = vmatpush1.msra.mxu0 0.0
        %1675 = vmatprep.subr.mxu0 0.0
        %1676 = vmatpush1.msra.mxu0 0.0
        %1677 = vmatprep.subr.mxu0 0.0
        %1678 = vmatpush1.msra.mxu0 0.0
        %1679 = vmatprep.subr.mxu0 0.0
        %1680 = vmatpush1.msra.mxu0 0.0
        %1681 = vmatprep.subr.mxu0 0.0
        %1682 = vmatpush1.msra.mxu0 0.0
        %1683 = vmatprep.subr.mxu0 0.0
        %1684 = vmatpush1.msra.mxu0 0.0
        %1685 = vmatprep.subr.mxu0 0.0
        %1686 = vmatpush1.msra.mxu0 0.0
        %1687 = vmatprep.subr.mxu0 0.0
        %1688 = vmatpush1.msra.mxu0 0.0
        %1689 = vmatprep.subr.mxu0 0.0
        %1690 = vmatpush1.msra.mxu0 0.0
        %1691 = vmatprep.subr.mxu0 0.0
        %1692 = vmatpush1.msra.mxu0 0.0
        %1693 = vmatprep.subr.mxu0 0.0
        %1694 = vmatpush1.msra.mxu0 0.0
        %1695 = vmatprep.subr.mxu0 0.0
        %1696 = vmatpush1.msra.mxu0 0.0
        %1697 = vmatprep.subr.mxu0 0.0
        %1698 = vmatpush1.msra.mxu0 0.0
        %1699 = vmatprep.subr.mxu0 0.0
        %1700 = vmatpush1.msra.mxu0 0.0
        %1701 = vmatprep.subr.mxu0 0.0
        %1702 = vmatpush1.msra.mxu0 0.0
        %1703 = vmatprep.subr.mxu0 0.0
        %1704 = vmatpush1.msra.mxu0 0.0
        %1705 = vmatprep.subr.mxu0 0.0
        %1706 = vmatpush1.msra.mxu0 0.0
        %1707 = vmatprep.mubr.f32.mxu0 0.0
        %1708 = vmatmul.mubr.f32.gmra.mrb[0].mxu0 %v1641
        %v1709 = vpop.f32.mrb[0].mxu0
        %v1710 = vadd.f32 0.0, %v1709
        %v1711 = vpop.f32.mrb[0].mxu0
        %1712 = vdwg.mxu0
        %v1714 = vsel %vm1478, %v1561, 0
        %1716 = vmatprep.subr.mxu0 0.0
        %1717 = vmatpush1.msra.mxu0 %v855
        %1718 = vmatprep.subr.mxu0 0.0
        %1719 = vmatpush1.msra.mxu0 0.0
        %1720 = vmatprep.subr.mxu0 0.0
        %1721 = vmatpush1.msra.mxu0 0.0
        %1722 = vmatprep.subr.mxu0 0.0
        %1723 = vmatpush1.msra.mxu0 0.0
        %1724 = vmatprep.subr.mxu0 0.0
        %1725 = vmatpush1.msra.mxu0 0.0
        %1726 = vmatprep.subr.mxu0 0.0
        %1727 = vmatpush1.msra.mxu0 0.0
        %1728 = vmatprep.subr.mxu0 0.0
        %1729 = vmatpush1.msra.mxu0 0.0
        %1730 = vmatprep.subr.mxu0 0.0
        %1731 = vmatpush1.msra.mxu0 0.0
        %1732 = vmatprep.subr.mxu0 0.0
        %1733 = vmatpush1.msra.mxu0 0.0
        %1734 = vmatprep.subr.mxu0 0.0
        %1735 = vmatpush1.msra.mxu0 0.0
        %1736 = vmatprep.subr.mxu0 0.0
        %1737 = vmatpush1.msra.mxu0 0.0
        %1738 = vmatprep.subr.mxu0 0.0
        %1739 = vmatpush1.msra.mxu0 0.0
        %1740 = vmatprep.subr.mxu0 0.0
        %1741 = vmatpush1.msra.mxu0 0.0
        %1742 = vmatprep.subr.mxu0 0.0
        %1743 = vmatpush1.msra.mxu0 0.0
        %1744 = vmatprep.subr.mxu0 0.0
        %1745 = vmatpush1.msra.mxu0 0.0
        %1746 = vmatprep.subr.mxu0 0.0
        %1747 = vmatpush1.msra.mxu0 0.0
        %1748 = vmatprep.subr.mxu0 0.0
        %1749 = vmatpush1.msra.mxu0 0.0
        %1750 = vmatprep.subr.mxu0 0.0
        %1751 = vmatpush1.msra.mxu0 0.0
        %1752 = vmatprep.subr.mxu0 0.0
        %1753 = vmatpush1.msra.mxu0 0.0
        %1754 = vmatprep.subr.mxu0 0.0
        %1755 = vmatpush1.msra.mxu0 0.0
        %1756 = vmatprep.subr.mxu0 0.0
        %1757 = vmatpush1.msra.mxu0 0.0
        %1758 = vmatprep.subr.mxu0 0.0
        %1759 = vmatpush1.msra.mxu0 0.0
        %1760 = vmatprep.subr.mxu0 0.0
        %1761 = vmatpush1.msra.mxu0 0.0
        %1762 = vmatprep.subr.mxu0 0.0
        %1763 = vmatpush1.msra.mxu0 0.0
        %1764 = vmatprep.subr.mxu0 0.0
        %1765 = vmatpush1.msra.mxu0 0.0
        %1766 = vmatprep.subr.mxu0 0.0
        %1767 = vmatpush1.msra.mxu0 0.0
        %1768 = vmatprep.subr.mxu0 0.0
        %1769 = vmatpush1.msra.mxu0 0.0
        %1770 = vmatprep.subr.mxu0 0.0
        %1771 = vmatpush1.msra.mxu0 0.0
        %1772 = vmatprep.subr.mxu0 0.0
        %1773 = vmatpush1.msra.mxu0 0.0
        %1774 = vmatprep.subr.mxu0 0.0
        %1775 = vmatpush1.msra.mxu0 0.0
        %1776 = vmatprep.subr.mxu0 0.0
        %1777 = vmatpush1.msra.mxu0 0.0
        %1778 = vmatprep.subr.mxu0 0.0
        %1779 = vmatpush1.msra.mxu0 0.0
        %1780 = vmatprep.mubr.f32.mxu0 0.0
        %1781 = vmatmul.mubr.f32.gmra.mrb[0].mxu0 %v1714
        %v1782 = vpop.f32.mrb[0].mxu0
        %v1783 = vadd.f32 0.0, %v1782
        %v1784 = vpop.f32.mrb[0].mxu0
        %1785 = vdwg.mxu0
        %v1787 = vsel %vm1478, %v1562, 0
        %1789 = vmatprep.subr.mxu0 0.0
        %1790 = vmatpush1.msra.mxu0 %v856
        %1791 = vmatprep.subr.mxu0 0.0
        %1792 = vmatpush1.msra.mxu0 0.0
        %1793 = vmatprep.subr.mxu0 0.0
        %1794 = vmatpush1.msra.mxu0 0.0
        %1795 = vmatprep.subr.mxu0 0.0
        %1796 = vmatpush1.msra.mxu0 0.0
        %1797 = vmatprep.subr.mxu0 0.0
        %1798 = vmatpush1.msra.mxu0 0.0
        %1799 = vmatprep.subr.mxu0 0.0
        %1800 = vmatpush1.msra.mxu0 0.0
        %1801 = vmatprep.subr.mxu0 0.0
        %1802 = vmatpush1.msra.mxu0 0.0
        %1803 = vmatprep.subr.mxu0 0.0
        %1804 = vmatpush1.msra.mxu0 0.0
        %1805 = vmatprep.subr.mxu0 0.0
        %1806 = vmatpush1.msra.mxu0 0.0
        %1807 = vmatprep.subr.mxu0 0.0
        %1808 = vmatpush1.msra.mxu0 0.0
        %1809 = vmatprep.subr.mxu0 0.0
        %1810 = vmatpush1.msra.mxu0 0.0
        %1811 = vmatprep.subr.mxu0 0.0
        %1812 = vmatpush1.msra.mxu0 0.0
        %1813 = vmatprep.subr.mxu0 0.0
        %1814 = vmatpush1.msra.mxu0 0.0
        %1815 = vmatprep.subr.mxu0 0.0
        %1816 = vmatpush1.msra.mxu0 0.0
        %1817 = vmatprep.subr.mxu0 0.0
        %1818 = vmatpush1.msra.mxu0 0.0
        %1819 = vmatprep.subr.mxu0 0.0
        %1820 = vmatpush1.msra.mxu0 0.0
        %1821 = vmatprep.subr.mxu0 0.0
        %1822 = vmatpush1.msra.mxu0 0.0
        %1823 = vmatprep.subr.mxu0 0.0
        %1824 = vmatpush1.msra.mxu0 0.0
        %1825 = vmatprep.subr.mxu0 0.0
        %1826 = vmatpush1.msra.mxu0 0.0
        %1827 = vmatprep.subr.mxu0 0.0
        %1828 = vmatpush1.msra.mxu0 0.0
        %1829 = vmatprep.subr.mxu0 0.0
        %1830 = vmatpush1.msra.mxu0 0.0
        %1831 = vmatprep.subr.mxu0 0.0
        %1832 = vmatpush1.msra.mxu0 0.0
        %1833 = vmatprep.subr.mxu0 0.0
        %1834 = vmatpush1.msra.mxu0 0.0
        %1835 = vmatprep.subr.mxu0 0.0
        %1836 = vmatpush1.msra.mxu0 0.0
        %1837 = vmatprep.subr.mxu0 0.0
        %1838 = vmatpush1.msra.mxu0 0.0
        %1839 = vmatprep.subr.mxu0 0.0
        %1840 = vmatpush1.msra.mxu0 0.0
        %1841 = vmatprep.subr.mxu0 0.0
        %1842 = vmatpush1.msra.mxu0 0.0
        %1843 = vmatprep.subr.mxu0 0.0
        %1844 = vmatpush1.msra.mxu0 0.0
        %1845 = vmatprep.subr.mxu0 0.0
        %1846 = vmatpush1.msra.mxu0 0.0
        %1847 = vmatprep.subr.mxu0 0.0
        %1848 = vmatpush1.msra.mxu0 0.0
        %1849 = vmatprep.subr.mxu0 0.0
        %1850 = vmatpush1.msra.mxu0 0.0
        %1851 = vmatprep.subr.mxu0 0.0
        %1852 = vmatpush1.msra.mxu0 0.0
        %1853 = vmatprep.mubr.f32.mxu0 0.0
        %1854 = vmatmul.mubr.f32.gmra.mrb[0].mxu0 %v1787
        %v1855 = vpop.f32.mrb[0].mxu0
        %v1856 = vadd.f32 0.0, %v1855
        %v1857 = vpop.f32.mrb[0].mxu0
        %1858 = vdwg.mxu0
        %v1860 = vsel %vm1478, %v1563, 0
        %1862 = vmatprep.subr.mxu0 0.0
        %1863 = vmatpush1.msra.mxu0 %v857
        %1864 = vmatprep.subr.mxu0 0.0
        %1865 = vmatpush1.msra.mxu0 0.0
        %1866 = vmatprep.subr.mxu0 0.0
        %1867 = vmatpush1.msra.mxu0 0.0
        %1868 = vmatprep.subr.mxu0 0.0
        %1869 = vmatpush1.msra.mxu0 0.0
        %1870 = vmatprep.subr.mxu0 0.0
        %1871 = vmatpush1.msra.mxu0 0.0
        %1872 = vmatprep.subr.mxu0 0.0
        %1873 = vmatpush1.msra.mxu0 0.0
        %1874 = vmatprep.subr.mxu0 0.0
        %1875 = vmatpush1.msra.mxu0 0.0
        %1876 = vmatprep.subr.mxu0 0.0
        %1877 = vmatpush1.msra.mxu0 0.0
        %1878 = vmatprep.subr.mxu0 0.0
        %1879 = vmatpush1.msra.mxu0 0.0
        %1880 = vmatprep.subr.mxu0 0.0
        %1881 = vmatpush1.msra.mxu0 0.0
        %1882 = vmatprep.subr.mxu0 0.0
        %1883 = vmatpush1.msra.mxu0 0.0
        %1884 = vmatprep.subr.mxu0 0.0
        %1885 = vmatpush1.msra.mxu0 0.0
        %1886 = vmatprep.subr.mxu0 0.0
        %1887 = vmatpush1.msra.mxu0 0.0
        %1888 = vmatprep.subr.mxu0 0.0
        %1889 = vmatpush1.msra.mxu0 0.0
        %1890 = vmatprep.subr.mxu0 0.0
        %1891 = vmatpush1.msra.mxu0 0.0
        %1892 = vmatprep.subr.mxu0 0.0
        %1893 = vmatpush1.msra.mxu0 0.0
        %1894 = vmatprep.subr.mxu0 0.0
        %1895 = vmatpush1.msra.mxu0 0.0
        %1896 = vmatprep.subr.mxu0 0.0
        %1897 = vmatpush1.msra.mxu0 0.0
        %1898 = vmatprep.subr.mxu0 0.0
        %1899 = vmatpush1.msra.mxu0 0.0
        %1900 = vmatprep.subr.mxu0 0.0
        %1901 = vmatpush1.msra.mxu0 0.0
        %1902 = vmatprep.subr.mxu0 0.0
        %1903 = vmatpush1.msra.mxu0 0.0
        %1904 = vmatprep.subr.mxu0 0.0
        %1905 = vmatpush1.msra.mxu0 0.0
        %1906 = vmatprep.subr.mxu0 0.0
        %1907 = vmatpush1.msra.mxu0 0.0
        %1908 = vmatprep.subr.mxu0 0.0
        %1909 = vmatpush1.msra.mxu0 0.0
        %1910 = vmatprep.subr.mxu0 0.0
        %1911 = vmatpush1.msra.mxu0 0.0
        %1912 = vmatprep.subr.mxu0 0.0
        %1913 = vmatpush1.msra.mxu0 0.0
        %1914 = vmatprep.subr.mxu0 0.0
        %1915 = vmatpush1.msra.mxu0 0.0
        %1916 = vmatprep.subr.mxu0 0.0
        %1917 = vmatpush1.msra.mxu0 0.0
        %1918 = vmatprep.subr.mxu0 0.0
        %1919 = vmatpush1.msra.mxu0 0.0
        %1920 = vmatprep.subr.mxu0 0.0
        %1921 = vmatpush1.msra.mxu0 0.0
        %1922 = vmatprep.subr.mxu0 0.0
        %1923 = vmatpush1.msra.mxu0 0.0
        %1924 = vmatprep.subr.mxu0 0.0
        %1925 = vmatpush1.msra.mxu0 0.0
        %1926 = vmatprep.mubr.f32.mxu0 0.0
        %1927 = vmatmul.mubr.f32.gmra.mrb[0].mxu0 %v1860
        %v1928 = vpop.f32.mrb[0].mxu0
        %v1929 = vadd.f32 0.0, %v1928
        %v1930 = vpop.f32.mrb[0].mxu0
        %1931 = vdwg.mxu0
        %v1933 = vsel %vm1478, %v1564, 0
        %1935 = vmatprep.subr.mxu0 0.0
        %1936 = vmatpush1.msra.mxu0 %v858
        %1937 = vmatprep.subr.mxu0 0.0
        %1938 = vmatpush1.msra.mxu0 0.0
        %1939 = vmatprep.subr.mxu0 0.0
        %1940 = vmatpush1.msra.mxu0 0.0
        %1941 = vmatprep.subr.mxu0 0.0
        %1942 = vmatpush1.msra.mxu0 0.0
        %1943 = vmatprep.subr.mxu0 0.0
        %1944 = vmatpush1.msra.mxu0 0.0
        %1945 = vmatprep.subr.mxu0 0.0
        %1946 = vmatpush1.msra.mxu0 0.0
        %1947 = vmatprep.subr.mxu0 0.0
        %1948 = vmatpush1.msra.mxu0 0.0
        %1949 = vmatprep.subr.mxu0 0.0
        %1950 = vmatpush1.msra.mxu0 0.0
        %1951 = vmatprep.subr.mxu0 0.0
        %1952 = vmatpush1.msra.mxu0 0.0
        %1953 = vmatprep.subr.mxu0 0.0
        %1954 = vmatpush1.msra.mxu0 0.0
        %1955 = vmatprep.subr.mxu0 0.0
        %1956 = vmatpush1.msra.mxu0 0.0
        %1957 = vmatprep.subr.mxu0 0.0
        %1958 = vmatpush1.msra.mxu0 0.0
        %1959 = vmatprep.subr.mxu0 0.0
        %1960 = vmatpush1.msra.mxu0 0.0
        %1961 = vmatprep.subr.mxu0 0.0
        %1962 = vmatpush1.msra.mxu0 0.0
        %1963 = vmatprep.subr.mxu0 0.0
        %1964 = vmatpush1.msra.mxu0 0.0
        %1965 = vmatprep.subr.mxu0 0.0
        %1966 = vmatpush1.msra.mxu0 0.0
        %1967 = vmatprep.subr.mxu0 0.0
        %1968 = vmatpush1.msra.mxu0 0.0
        %1969 = vmatprep.subr.mxu0 0.0
        %1970 = vmatpush1.msra.mxu0 0.0
        %1971 = vmatprep.subr.mxu0 0.0
        %1972 = vmatpush1.msra.mxu0 0.0
        %1973 = vmatprep.subr.mxu0 0.0
        %1974 = vmatpush1.msra.mxu0 0.0
        %1975 = vmatprep.subr.mxu0 0.0
        %1976 = vmatpush1.msra.mxu0 0.0
        %1977 = vmatprep.subr.mxu0 0.0
        %1978 = vmatpush1.msra.mxu0 0.0
        %1979 = vmatprep.subr.mxu0 0.0
        %1980 = vmatpush1.msra.mxu0 0.0
        %1981 = vmatprep.subr.mxu0 0.0
        %1982 = vmatpush1.msra.mxu0 0.0
        %1983 = vmatprep.subr.mxu0 0.0
        %1984 = vmatpush1.msra.mxu0 0.0
        %1985 = vmatprep.subr.mxu0 0.0
        %1986 = vmatpush1.msra.mxu0 0.0
        %1987 = vmatprep.subr.mxu0 0.0
        %1988 = vmatpush1.msra.mxu0 0.0
        %1989 = vmatprep.subr.mxu0 0.0
        %1990 = vmatpush1.msra.mxu0 0.0
        %1991 = vmatprep.subr.mxu0 0.0
        %1992 = vmatpush1.msra.mxu0 0.0
        %1993 = vmatprep.subr.mxu0 0.0
        %1994 = vmatpush1.msra.mxu0 0.0
        %1995 = vmatprep.subr.mxu0 0.0
        %1996 = vmatpush1.msra.mxu0 0.0
        %1997 = vmatprep.subr.mxu0 0.0
        %1998 = vmatpush1.msra.mxu0 0.0
        %1999 = vmatprep.mubr.f32.mxu0 0.0
        %2000 = vmatmul.mubr.f32.gmra.mrb[0].mxu0 %v1933
        %v2001 = vpop.f32.mrb[0].mxu0
        %v2002 = vadd.f32 0.0, %v2001
        %v2003 = vpop.f32.mrb[0].mxu0
        %2004 = vdwg.mxu0
        %v2006 = vsel %vm1478, %v1565, 0
        %2008 = vmatprep.subr.mxu0 0.0
        %2009 = vmatpush1.msra.mxu0 %v859
        %2010 = vmatprep.subr.mxu0 0.0
        %2011 = vmatpush1.msra.mxu0 0.0
        %2012 = vmatprep.subr.mxu0 0.0
        %2013 = vmatpush1.msra.mxu0 0.0
        %2014 = vmatprep.subr.mxu0 0.0
        %2015 = vmatpush1.msra.mxu0 0.0
        %2016 = vmatprep.subr.mxu0 0.0
        %2017 = vmatpush1.msra.mxu0 0.0
        %2018 = vmatprep.subr.mxu0 0.0
        %2019 = vmatpush1.msra.mxu0 0.0
        %2020 = vmatprep.subr.mxu0 0.0
        %2021 = vmatpush1.msra.mxu0 0.0
        %2022 = vmatprep.subr.mxu0 0.0
        %2023 = vmatpush1.msra.mxu0 0.0
        %2024 = vmatprep.subr.mxu0 0.0
        %2025 = vmatpush1.msra.mxu0 0.0
        %2026 = vmatprep.subr.mxu0 0.0
        %2027 = vmatpush1.msra.mxu0 0.0
        %2028 = vmatprep.subr.mxu0 0.0
        %2029 = vmatpush1.msra.mxu0 0.0
        %2030 = vmatprep.subr.mxu0 0.0
        %2031 = vmatpush1.msra.mxu0 0.0
        %2032 = vmatprep.subr.mxu0 0.0
        %2033 = vmatpush1.msra.mxu0 0.0
        %2034 = vmatprep.subr.mxu0 0.0
        %2035 = vmatpush1.msra.mxu0 0.0
        %2036 = vmatprep.subr.mxu0 0.0
        %2037 = vmatpush1.msra.mxu0 0.0
        %2038 = vmatprep.subr.mxu0 0.0
        %2039 = vmatpush1.msra.mxu0 0.0
        %2040 = vmatprep.subr.mxu0 0.0
        %2041 = vmatpush1.msra.mxu0 0.0
        %2042 = vmatprep.subr.mxu0 0.0
        %2043 = vmatpush1.msra.mxu0 0.0
        %2044 = vmatprep.subr.mxu0 0.0
        %2045 = vmatpush1.msra.mxu0 0.0
        %2046 = vmatprep.subr.mxu0 0.0
        %2047 = vmatpush1.msra.mxu0 0.0
        %2048 = vmatprep.subr.mxu0 0.0
        %2049 = vmatpush1.msra.mxu0 0.0
        %2050 = vmatprep.subr.mxu0 0.0
        %2051 = vmatpush1.msra.mxu0 0.0
        %2052 = vmatprep.subr.mxu0 0.0
        %2053 = vmatpush1.msra.mxu0 0.0
        %2054 = vmatprep.subr.mxu0 0.0
        %2055 = vmatpush1.msra.mxu0 0.0
        %2056 = vmatprep.subr.mxu0 0.0
        %2057 = vmatpush1.msra.mxu0 0.0
        %2058 = vmatprep.subr.mxu0 0.0
        %2059 = vmatpush1.msra.mxu0 0.0
        %2060 = vmatprep.subr.mxu0 0.0
        %2061 = vmatpush1.msra.mxu0 0.0
        %2062 = vmatprep.subr.mxu0 0.0
        %2063 = vmatpush1.msra.mxu0 0.0
        %2064 = vmatprep.subr.mxu0 0.0
        %2065 = vmatpush1.msra.mxu0 0.0
        %2066 = vmatprep.subr.mxu0 0.0
        %2067 = vmatpush1.msra.mxu0 0.0
        %2068 = vmatprep.subr.mxu0 0.0
        %2069 = vmatpush1.msra.mxu0 0.0
        %2070 = vmatprep.subr.mxu0 0.0
        %2071 = vmatpush1.msra.mxu0 0.0
        %2072 = vmatprep.mubr.f32.mxu0 0.0
        %2073 = vmatmul.mubr.f32.gmra.mrb[0].mxu0 %v2006
        %v2074 = vpop.f32.mrb[0].mxu0
        %v2075 = vadd.f32 0.0, %v2074
        %v2076 = vpop.f32.mrb[0].mxu0
        %2077 = vdwg.mxu0
        %v2079 = vsel %vm1478, %v1566, 0
        %2081 = vmatprep.subr.mxu0 0.0
        %2082 = vmatpush1.msra.mxu0 %v860
        %2083 = vmatprep.subr.mxu0 0.0
        %2084 = vmatpush1.msra.mxu0 0.0
        %2085 = vmatprep.subr.mxu0 0.0
        %2086 = vmatpush1.msra.mxu0 0.0
        %2087 = vmatprep.subr.mxu0 0.0
        %2088 = vmatpush1.msra.mxu0 0.0
        %2089 = vmatprep.subr.mxu0 0.0
        %2090 = vmatpush1.msra.mxu0 0.0
        %2091 = vmatprep.subr.mxu0 0.0
        %2092 = vmatpush1.msra.mxu0 0.0
        %2093 = vmatprep.subr.mxu0 0.0
        %2094 = vmatpush1.msra.mxu0 0.0
        %2095 = vmatprep.subr.mxu0 0.0
        %2096 = vmatpush1.msra.mxu0 0.0
        %2097 = vmatprep.subr.mxu0 0.0
        %2098 = vmatpush1.msra.mxu0 0.0
        %2099 = vmatprep.subr.mxu0 0.0
        %2100 = vmatpush1.msra.mxu0 0.0
        %2101 = vmatprep.subr.mxu0 0.0
        %2102 = vmatpush1.msra.mxu0 0.0
        %2103 = vmatprep.subr.mxu0 0.0
        %2104 = vmatpush1.msra.mxu0 0.0
        %2105 = vmatprep.subr.mxu0 0.0
        %2106 = vmatpush1.msra.mxu0 0.0
        %2107 = vmatprep.subr.mxu0 0.0
        %2108 = vmatpush1.msra.mxu0 0.0
        %2109 = vmatprep.subr.mxu0 0.0
        %2110 = vmatpush1.msra.mxu0 0.0
        %2111 = vmatprep.subr.mxu0 0.0
        %2112 = vmatpush1.msra.mxu0 0.0
        %2113 = vmatprep.subr.mxu0 0.0
        %2114 = vmatpush1.msra.mxu0 0.0
        %2115 = vmatprep.subr.mxu0 0.0
        %2116 = vmatpush1.msra.mxu0 0.0
        %2117 = vmatprep.subr.mxu0 0.0
        %2118 = vmatpush1.msra.mxu0 0.0
        %2119 = vmatprep.subr.mxu0 0.0
        %2120 = vmatpush1.msra.mxu0 0.0
        %2121 = vmatprep.subr.mxu0 0.0
        %2122 = vmatpush1.msra.mxu0 0.0
        %2123 = vmatprep.subr.mxu0 0.0
        %2124 = vmatpush1.msra.mxu0 0.0
        %2125 = vmatprep.subr.mxu0 0.0
        %2126 = vmatpush1.msra.mxu0 0.0
        %2127 = vmatprep.subr.mxu0 0.0
        %2128 = vmatpush1.msra.mxu0 0.0
        %2129 = vmatprep.subr.mxu0 0.0
        %2130 = vmatpush1.msra.mxu0 0.0
        %2131 = vmatprep.subr.mxu0 0.0
        %2132 = vmatpush1.msra.mxu0 0.0
        %2133 = vmatprep.subr.mxu0 0.0
        %2134 = vmatpush1.msra.mxu0 0.0
        %2135 = vmatprep.subr.mxu0 0.0
        %2136 = vmatpush1.msra.mxu0 0.0
        %2137 = vmatprep.subr.mxu0 0.0
        %2138 = vmatpush1.msra.mxu0 0.0
        %2139 = vmatprep.subr.mxu0 0.0
        %2140 = vmatpush1.msra.mxu0 0.0
        %2141 = vmatprep.subr.mxu0 0.0
        %2142 = vmatpush1.msra.mxu0 0.0
        %2143 = vmatprep.subr.mxu0 0.0
        %2144 = vmatpush1.msra.mxu0 0.0
        %2145 = vmatprep.mubr.f32.mxu0 0.0
        %2146 = vmatmul.mubr.f32.gmra.mrb[0].mxu0 %v2079
        %v2147 = vpop.f32.mrb[0].mxu0
        %v2148 = vadd.f32 0.0, %v2147
        %v2149 = vpop.f32.mrb[0].mxu0
        %2150 = vdwg.mxu0
        %v2151 = vcombine.low %v1637, %v1783
        %v2152 = vcombine.high %v1637, %v1783
        %v2154 = vunpack.c.l.s4 1983009808
        %v2155 = vunpack.c.0.s8 %v2154
        %v2156 = vlaneseq
        %v2157 = vshrl.u32 %v2156, 7
        %v2158 = vsub.s32 %v2155, %v2157
        %v2159 = vrot.slane %v2151, %v2158
        %v2161 = vunpack.c.l.s4 1983009808
        %v2162 = vunpack.c.0.s8 %v2161
        %v2163 = vlaneseq
        %v2164 = vshrl.u32 %v2163, 7
        %v2165 = vsub.s32 %v2162, %v2164
        %v2166 = vrot.slane %v2152, %v2165
        %v2167 = vcombine.low %v1710, %v1856
        %v2168 = vcombine.high %v1710, %v1856
        %v2170 = vunpack.c.l.s4 1983009808
        %v2171 = vunpack.c.0.s8 %v2170
        %v2172 = vlaneseq
        %v2173 = vshrl.u32 %v2172, 7
        %v2174 = vsub.s32 %v2171, %v2173
        %v2175 = vrot.slane %v2167, %v2174
        %v2177 = vunpack.c.l.s4 1983009808
        %v2178 = vunpack.c.0.s8 %v2177
        %v2179 = vlaneseq
        %v2180 = vshrl.u32 %v2179, 7
        %v2181 = vsub.s32 %v2178, %v2180
        %v2182 = vrot.slane %v2168, %v2181
        %v2183 = vcombine.low %v1929, %v2075
        %v2184 = vcombine.high %v1929, %v2075
        %v2186 = vunpack.c.l.s4 1983009808
        %v2187 = vunpack.c.0.s8 %v2186
        %v2188 = vlaneseq
        %v2189 = vshrl.u32 %v2188, 7
        %v2190 = vsub.s32 %v2187, %v2189
        %v2191 = vrot.slane %v2183, %v2190
        %v2193 = vunpack.c.l.s4 1983009808
        %v2194 = vunpack.c.0.s8 %v2193
        %v2195 = vlaneseq
        %v2196 = vshrl.u32 %v2195, 7
        %v2197 = vsub.s32 %v2194, %v2196
        %v2198 = vrot.slane %v2184, %v2197
        %v2199 = vcombine.low %v2002, %v2148
        %v2200 = vcombine.high %v2002, %v2148
        %v2202 = vunpack.c.l.s4 1983009808
        %v2203 = vunpack.c.0.s8 %v2202
        %v2204 = vlaneseq
        %v2205 = vshrl.u32 %v2204, 7
        %v2206 = vsub.s32 %v2203, %v2205
        %v2207 = vrot.slane %v2199, %v2206
        %v2209 = vunpack.c.l.s4 1983009808
        %v2210 = vunpack.c.0.s8 %v2209
        %v2211 = vlaneseq
        %v2212 = vshrl.u32 %v2211, 7
        %v2213 = vsub.s32 %v2210, %v2212
        %v2214 = vrot.slane %v2200, %v2213
        %v2215 = vcombine.low %v2159, %v2175
        %v2216 = vcombine.high %v2159, %v2175
        %v2218 = vunpack.c.l.s4 1934713408
        %v2219 = vunpack.c.0.s8 %v2218
        %v2220 = vlaneseq
        %v2221 = vshrl.u32 %v2220, 7
        %v2222 = vsub.s32 %v2219, %v2221
        %v2223 = vrot.slane %v2215, %v2222
        %v2225 = vunpack.c.l.s4 1934713408
        %v2226 = vunpack.c.0.s8 %v2225
        %v2227 = vlaneseq
        %v2228 = vshrl.u32 %v2227, 7
        %v2229 = vsub.s32 %v2226, %v2228
        %v2230 = vrot.slane %v2216, %v2229
        %v2231 = vcombine.low %v2166, %v2182
        %v2232 = vcombine.high %v2166, %v2182
        %v2234 = vunpack.c.l.s4 1934713408
        %v2235 = vunpack.c.0.s8 %v2234
        %v2236 = vlaneseq
        %v2237 = vshrl.u32 %v2236, 7
        %v2238 = vsub.s32 %v2235, %v2237
        %v2239 = vrot.slane %v2231, %v2238
        %v2241 = vunpack.c.l.s4 1934713408
        %v2242 = vunpack.c.0.s8 %v2241
        %v2243 = vlaneseq
        %v2244 = vshrl.u32 %v2243, 7
        %v2245 = vsub.s32 %v2242, %v2244
        %v2246 = vrot.slane %v2232, %v2245
        %v2247 = vcombine.low %v2191, %v2207
        %v2248 = vcombine.high %v2191, %v2207
        %v2250 = vunpack.c.l.s4 1934713408
        %v2251 = vunpack.c.0.s8 %v2250
        %v2252 = vlaneseq
        %v2253 = vshrl.u32 %v2252, 7
        %v2254 = vsub.s32 %v2251, %v2253
        %v2255 = vrot.slane %v2247, %v2254
        %v2257 = vunpack.c.l.s4 1934713408
        %v2258 = vunpack.c.0.s8 %v2257
        %v2259 = vlaneseq
        %v2260 = vshrl.u32 %v2259, 7
        %v2261 = vsub.s32 %v2258, %v2260
        %v2262 = vrot.slane %v2248, %v2261
        %v2263 = vcombine.low %v2198, %v2214
        %v2264 = vcombine.high %v2198, %v2214
        %v2266 = vunpack.c.l.s4 1934713408
        %v2267 = vunpack.c.0.s8 %v2266
        %v2268 = vlaneseq
        %v2269 = vshrl.u32 %v2268, 7
        %v2270 = vsub.s32 %v2267, %v2269
        %v2271 = vrot.slane %v2263, %v2270
        %v2273 = vunpack.c.l.s4 1934713408
        %v2274 = vunpack.c.0.s8 %v2273
        %v2275 = vlaneseq
        %v2276 = vshrl.u32 %v2275, 7
        %v2277 = vsub.s32 %v2274, %v2276
        %v2278 = vrot.slane %v2264, %v2277
        %v2279 = vcombine.low %v2223, %v2255
        %v2280 = vcombine.high %v2223, %v2255
        %v2281 = vcombine.low %v2230, %v2262
        %v2282 = vcombine.high %v2230, %v2262
        %v2283 = vcombine.low %v2239, %v2271
        %v2284 = vcombine.high %v2239, %v2271
        %v2285 = vcombine.low %v2246, %v2278
        %v2286 = vcombine.high %v2246, %v2278
        %v2287 = vcombine.low %v2279, %v2281
        %v2288 = vcombine.high %v2279, %v2281
        %v2290 = vunpack.c.l.s4 1983009808
        %v2291 = vunpack.c.0.s8 %v2290
        %v2292 = vlaneseq
        %v2293 = vshrl.u32 %v2292, 7
        %v2294 = vsub.s32 %v2291, %v2293
        %v2295 = vrot.slane %v2287, %v2294
        %v2297 = vunpack.c.l.s4 1983009808
        %v2298 = vunpack.c.0.s8 %v2297
        %v2299 = vlaneseq
        %v2300 = vshrl.u32 %v2299, 7
        %v2301 = vsub.s32 %v2298, %v2300
        %v2302 = vrot.slane %v2288, %v2301
        %v2303 = vcombine.low %v2280, %v2282
        %v2304 = vcombine.high %v2280, %v2282
        %v2306 = vunpack.c.l.s4 1983009808
        %v2307 = vunpack.c.0.s8 %v2306
        %v2308 = vlaneseq
        %v2309 = vshrl.u32 %v2308, 7
        %v2310 = vsub.s32 %v2307, %v2309
        %v2311 = vrot.slane %v2303, %v2310
        %v2313 = vunpack.c.l.s4 1983009808
        %v2314 = vunpack.c.0.s8 %v2313
        %v2315 = vlaneseq
        %v2316 = vshrl.u32 %v2315, 7
        %v2317 = vsub.s32 %v2314, %v2316
        %v2318 = vrot.slane %v2304, %v2317
        %v2319 = vcombine.low %v2283, %v2285
        %v2320 = vcombine.high %v2283, %v2285
        %v2322 = vunpack.c.l.s4 1983009808
        %v2323 = vunpack.c.0.s8 %v2322
        %v2324 = vlaneseq
        %v2325 = vshrl.u32 %v2324, 7
        %v2326 = vsub.s32 %v2323, %v2325
        %v2327 = vrot.slane %v2319, %v2326
        %v2329 = vunpack.c.l.s4 1983009808
        %v2330 = vunpack.c.0.s8 %v2329
        %v2331 = vlaneseq
        %v2332 = vshrl.u32 %v2331, 7
        %v2333 = vsub.s32 %v2330, %v2332
        %v2334 = vrot.slane %v2320, %v2333
        %v2335 = vcombine.low %v2284, %v2286
        %v2336 = vcombine.high %v2284, %v2286
        %v2338 = vunpack.c.l.s4 1983009808
        %v2339 = vunpack.c.0.s8 %v2338
        %v2340 = vlaneseq
        %v2341 = vshrl.u32 %v2340, 7
        %v2342 = vsub.s32 %v2339, %v2341
        %v2343 = vrot.slane %v2335, %v2342
        %v2345 = vunpack.c.l.s4 1983009808
        %v2346 = vunpack.c.0.s8 %v2345
        %v2347 = vlaneseq
        %v2348 = vshrl.u32 %v2347, 7
        %v2349 = vsub.s32 %v2346, %v2348
        %v2350 = vrot.slane %v2336, %v2349
        %v2351 = vcombine.low %v2295, %v2311
        %v2352 = vcombine.high %v2295, %v2311
        %v2354 = vunpack.c.l.s4 1934713408
        %v2355 = vunpack.c.0.s8 %v2354
        %v2356 = vlaneseq
        %v2357 = vshrl.u32 %v2356, 7
        %v2358 = vsub.s32 %v2355, %v2357
        %v2359 = vrot.slane %v2351, %v2358
        %v2361 = vunpack.c.l.s4 1934713408
        %v2362 = vunpack.c.0.s8 %v2361
        %v2363 = vlaneseq
        %v2364 = vshrl.u32 %v2363, 7
        %v2365 = vsub.s32 %v2362, %v2364
        %v2366 = vrot.slane %v2352, %v2365
        %v2367 = vcombine.low %v2302, %v2318
        %v2368 = vcombine.high %v2302, %v2318
        %v2370 = vunpack.c.l.s4 1934713408
        %v2371 = vunpack.c.0.s8 %v2370
        %v2372 = vlaneseq
        %v2373 = vshrl.u32 %v2372, 7
        %v2374 = vsub.s32 %v2371, %v2373
        %v2375 = vrot.slane %v2367, %v2374
        %v2377 = vunpack.c.l.s4 1934713408
        %v2378 = vunpack.c.0.s8 %v2377
        %v2379 = vlaneseq
        %v2380 = vshrl.u32 %v2379, 7
        %v2381 = vsub.s32 %v2378, %v2380
        %v2382 = vrot.slane %v2368, %v2381
        %v2383 = vcombine.low %v2327, %v2343
        %v2384 = vcombine.high %v2327, %v2343
        %v2386 = vunpack.c.l.s4 1934713408
        %v2387 = vunpack.c.0.s8 %v2386
        %v2388 = vlaneseq
        %v2389 = vshrl.u32 %v2388, 7
        %v2390 = vsub.s32 %v2387, %v2389
        %v2391 = vrot.slane %v2383, %v2390
        %v2393 = vunpack.c.l.s4 1934713408
        %v2394 = vunpack.c.0.s8 %v2393
        %v2395 = vlaneseq
        %v2396 = vshrl.u32 %v2395, 7
        %v2397 = vsub.s32 %v2394, %v2396
        %v2398 = vrot.slane %v2384, %v2397
        %v2399 = vcombine.low %v2334, %v2350
        %v2400 = vcombine.high %v2334, %v2350
        %v2402 = vunpack.c.l.s4 1934713408
        %v2403 = vunpack.c.0.s8 %v2402
        %v2404 = vlaneseq
        %v2405 = vshrl.u32 %v2404, 7
        %v2406 = vsub.s32 %v2403, %v2405
        %v2407 = vrot.slane %v2399, %v2406
        %v2409 = vunpack.c.l.s4 1934713408
        %v2410 = vunpack.c.0.s8 %v2409
        %v2411 = vlaneseq
        %v2412 = vshrl.u32 %v2411, 7
        %v2413 = vsub.s32 %v2410, %v2412
        %v2414 = vrot.slane %v2400, %v2413
        %v2415 = vcombine.low %v2359, %v2391
        %v2416 = vcombine.high %v2359, %v2391
        %v2417 = vcombine.low %v2366, %v2398
        %v2418 = vcombine.high %v2366, %v2398
        %v2419 = vcombine.low %v2375, %v2407
        %v2420 = vcombine.high %v2375, %v2407
        %v2421 = vcombine.low %v2382, %v2414
        %v2422 = vcombine.high %v2382, %v2414
        %2424 = vrot.lane.b32.xlu0 %v2416, 4
        %v2425 = vpop.permute.xlu0 %2424
        %2428 = vrot.lane.b32.xlu0 %v2417, 8
        %v2429 = vpop.permute.xlu0 %2428
        %2432 = vrot.lane.b32.xlu0 %v2418, 12
        %v2433 = vpop.permute.xlu0 %2432
        %2436 = vrot.lane.b32.xlu0 %v2419, 16
        %v2437 = vpop.permute.xlu0 %2436
        %2440 = vrot.lane.b32.xlu0 %v2420, 20
        %v2441 = vpop.permute.xlu0 %2440
        %2444 = vrot.lane.b32.xlu0 %v2421, 24
        %v2445 = vpop.permute.xlu0 %2444
        %2448 = vrot.lane.b32.xlu0 %v2422, 28
        %v2449 = vpop.permute.xlu0 %2448
        %v2451 = vsel %vm861, %v2415, %v2425
        %v2452 = vsel %vm1478, %v2451, %v2429
        %vm2453 = vcmask 97280
        %v2454 = vsel %vm2453, %v2452, %v2433
        %vm2455 = vcmask 130048
        %v2456 = vsel %vm2455, %v2454, %v2437
        %vm2457 = vcmask 162816
        %v2458 = vsel %vm2457, %v2456, %v2441
        %vm2459 = vcmask 195584
        %v2460 = vsel %vm2459, %v2458, %v2445
        %vm2461 = vcmask 228352
        %v2462 = vsel %vm2461, %v2460, %v2449
        %vm2463 = vcmask 261120
        %2464 = vst.msk [vmem:[%s428] sm:$0xff] %vm2463, %v2462
        %p2465 = scmp.lt.s32.totalorder %s18, 1
        %s2466 = scalar_select %p2465, %s18, 1
        %p2467 = scmp.lt.s32.totalorder %s19, 0
        %s2468 = scalar_select %p2467, %s19, 0
        %s2469 = sadd.s32 %s2468, %s2466
        %s2470 = smul.addr %s2469, 8
        %s2471 = scalar_lea.vmem %s3, %s2470
        // Predicated region
        $region147: #{attention_forward.4} parent=133 // pred_check
          %p2472 = pneg %p130
        $region148: #{attention_forward.4} parent=133 // pred_check_branch
          %2474 = sbr.rel (%p2472) target = $region150
        $region149: #{attention_forward.4} parent=133 // pred_region
          _
        $region150: #{attention_forward.4} parent=133 // pred_fallthru
          _
      $region134: #{attention_forward.4} parent=5 // pred_fallthru
        _
      %p2475 = scmp.le.s32.totalorder 2, %s9
      // Predicated region
      $region151: #{attention_forward.4} parent=5 // pred_check
        %p2476 = pneg %p2475
      $region152: #{attention_forward.4} parent=5 // pred_check_branch
        %2478 = sbr.rel (%p2476) target = $region154
      $region153: #{attention_forward.4} parent=5 // pred_region
        %s2479 = ssub.s32 %s9, 2
        // Predicated region
        $region155: #{attention_forward.4} parent=153 // pred_check
          %p2480 = pneg %p136
        $region156: #{attention_forward.4} parent=153 // pred_check_branch
          %2482 = sbr.rel (%p2480) target = $region158
        $region157: #{attention_forward.4} parent=153 // pred_region
          %p2483 = scmp.lt.s32.totalorder %s20, 1
          %s2484 = scalar_select %p2483, %s20, 1
          %p2485 = scmp.lt.s32.totalorder %s21, 0
          %s2486 = scalar_select %p2485, %s21, 0
          %s2487 = sadd.s32 %s2486, %s2484
          %s2488 = smul.addr %s2487, 8
          %s2489 = scalar_lea.vmem %s3, %s2488
        $region158: #{attention_forward.4} parent=153 // pred_fallthru
          _
      $region154: #{attention_forward.4} parent=5 // pred_fallthru
        _
    $region6: #{attention_forward.4} parent=1 // loop_footer
      %s13 = sadd.s32 1, %s9
    $region7: #{attention_forward.4} parent=1 // loop_footer_branch
      %8 = sbr.rel target = $region3
    $region8: #{attention_forward.4} parent=1 // loop_exit
      _

</llo_original>
